<compile_context>
chip_gen: v7x
topology: tpu7x:2x2x1
jax: 0.10.0
libtpu: 0.0.40
codegen_flags: <defaults>
</compile_context>

<pallas_src>
import functools

import numpy as np

import jax
import jax.numpy as jnp
from jax.experimental import pallas as pl
from jax.experimental.pallas import tpu as pltpu


def _vari_length_kernel(x_ref, mask_ref, wq_ref, wk_ref, wv_ref,
                        wfc_ref, bfc_ref, gamma_ref, beta_ref,
                        outres_ref, attn_ref,
                        *, tb, modal, n_head, d_k, d_v):
    M, H = modal, n_head
    rows = tb * M
    inv_temp = 1.0 / (float(d_k) ** 0.5)

    # ---- Fused per-modality projections ------------------------------------
    # Each batch row is replicated once per modality (broadcast) and masked to
    # that modality's feature range; the stacked weights occupy disjoint row
    # ranges, so ONE matmul per tensor reproduces the per-modality bias-free
    # Linears exactly (masked-off features hit structurally-zero weight rows).
    x = x_ref[...]                                            # (tb, D_in)
    mask = mask_ref[...]                                      # (M,  D_in)
    cdt = x.dtype                                             # matmul operand dtype
    X = (x[:, None, :] * mask[None, :, :]).reshape(rows, x.shape[-1])

    Q = jnp.dot(X, wq_ref[...], preferred_element_type=jnp.float32)  # (rows, H*dk)
    K = jnp.dot(X, wk_ref[...], preferred_element_type=jnp.float32)  # (rows, H*dk)
    V = jnp.dot(X, wv_ref[...], preferred_element_type=jnp.float32)  # (rows, H*dv)

    Qc = (Q * inv_temp).astype(cdt)       # temperature applied once, whole tensor
    Kc = K.astype(cdt)
    Vc = V.astype(cdt)

    # ---- Scores for every (batch, head) -------------------------------------
    # Static per-head loop (H is a small compile-time constant); single-batch
    # 3-D einsums lower reliably in Mosaic, 4-D multi-batch einsums do not.
    s_tiles = []
    for h in range(H):
        qh = Qc[:, h * d_k:(h + 1) * d_k].reshape(tb, M, d_k)
        kh = Kc[:, h * d_k:(h + 1) * d_k].reshape(tb, M, d_k)
        s_tiles.append(jnp.einsum('bmd,bnd->bmn', qh, kh,
                                  preferred_element_type=jnp.float32))
    S = jnp.stack(s_tiles, axis=0)        # (H, tb, M, M), f32

    # NOTE: the module's `attn /= abs(attn.min())` is a positive scalar scale;
    # F.normalize + softmax are invariant to it, so it is omitted (this also
    # removes the cross-batch coupling, enabling the parallel batch grid).
    # F.normalize(dim=-1): x / max(||x||_2, 1e-12)  — batched over (H, tb, M).
    ssq = jnp.sum(S * S, axis=-1, keepdims=True)
    A = S * jax.lax.rsqrt(jnp.maximum(ssq, 1e-24))
    # softmax(dim=-1): rows are L2-normalized so |A| <= 1 and exp is safe
    # without the usual row-max subtraction.
    E = jnp.exp(A)
    l = jnp.sum(E, axis=-1, keepdims=True)
    r = pl.reciprocal(l, approx=True)     # EUP seed ...
    r = r * (2.0 - l * r)                 # ... + one Newton step -> ~f32 accurate
    P = E * r                             # (H, tb, M, M)
    attn_ref[...] = P                     # single store of the attention output

    # ---- output = attn @ v, lane-contiguous heads so fc is ONE matmul -------
    o_cols = []
    for h in range(H):
        ph = P[h].astype(cdt)                                     # (tb, M, M)
        vh = Vc[:, h * d_v:(h + 1) * d_v].reshape(tb, M, d_v)
        oh = jnp.einsum('bmn,bnd->bmd', ph, vh,
                        preferred_element_type=jnp.float32)      # (tb, M, dv)
        o_cols.append(oh.reshape(rows, d_v))
    O = jnp.concatenate(o_cols, axis=-1)                          # (rows, H*dv)

    # fc (+bias) -> dropout (identity) -> +residual -> LayerNorm(eps=1e-6)
    Y = jnp.dot(O.astype(cdt), wfc_ref[...],
                preferred_element_type=jnp.float32) + bfc_ref[...]
    Y = Y + Q                              # residual = projected (unscaled) q
    mean = jnp.mean(Y, axis=-1, keepdims=True)
    Yc = Y - mean
    var = jnp.mean(Yc * Yc, axis=-1, keepdims=True)
    out = Yc * jax.lax.rsqrt(var + 1e-6) * gamma_ref[...] + beta_ref[...]

    # Lane-dense packed store: out in lanes [0, H*dv), residual in the rest —
    # one full-width (128-lane at test sizes) slab instead of two masked stores.
    outres_ref[...] = jnp.concatenate([out, Q], axis=-1)


def vari_length_input_forward(input_data, w_qs, w_ks, w_vs, w_fc, b_fc,
                              gamma, beta, *, dims, n_head, d_k, d_v,
                              matmul_dtype=jnp.bfloat16, batch_tile_rows=256):
    dims = tuple(int(d) for d in dims)
    bs = int(input_data.shape[0])
    modal = len(dims)
    d_in = int(sum(dims))
    HDK, HDV = n_head * d_k, n_head * d_v
    assert input_data.shape[1] == d_in

    # Static 0/1 modality-selection mask (modal, d_in).
    mask_np = np.zeros((modal, d_in), np.float32)
    off = 0
    for i, d in enumerate(dims):
        mask_np[i, off:off + d] = 1.0
        off += d
    mask = jnp.asarray(mask_np).astype(matmul_dtype)

    # Per-modality Linear weights stacked along the contraction dim so each
    # projection is a single wide matmul in-kernel.  Cast to the MXU operand
    # dtype wrapper-side (bf16 is MXU-native on v6e/v7x and halves DMA bytes);
    # accumulation stays f32 via preferred_element_type.
    wq = jnp.concatenate([w.T for w in w_qs], axis=0).astype(matmul_dtype)
    wk = jnp.concatenate([w.T for w in w_ks], axis=0).astype(matmul_dtype)
    wv = jnp.concatenate([w.T for w in w_vs], axis=0).astype(matmul_dtype)
    wfc = w_fc.T.astype(matmul_dtype)
    x = input_data.astype(matmul_dtype)

    # Batch tiling: aim at ~batch_tile_rows MXU rows per grid step.  The grid
    # axis is fully parallel (no cross-batch reduction remains), so it shards
    # across TensorCores on multi-TC parts and pipelines input DMA otherwise.
    tb_target = max(1, batch_tile_rows // modal)
    if bs <= tb_target:
        tb, nb, bs_pad = bs, 1, bs
    else:
        tb = ((tb_target + 7) // 8) * 8            # keep blocks sublane-divisible
        bs_pad = ((bs + tb - 1) // tb) * tb
        nb = bs_pad // tb
        if bs_pad != bs:                            # zero-padding is NaN-safe here
            x = jnp.pad(x, ((0, bs_pad - bs), (0, 0)))

    kernel = functools.partial(_vari_length_kernel, tb=tb, modal=modal,
                               n_head=n_head, d_k=d_k, d_v=d_v)

    outres, attn_hb = pl.pallas_call(
        kernel,
        grid=(nb,),
        out_shape=(
            jax.ShapeDtypeStruct((bs_pad * modal, HDV + HDK), jnp.float32),
            jax.ShapeDtypeStruct((n_head, bs_pad, modal, modal), jnp.float32),
        ),
        in_specs=[
            pl.BlockSpec((tb, d_in), lambda i: (i, 0)),       # x (batch-tiled)
            pl.BlockSpec((modal, d_in), lambda i: (0, 0)),    # modality mask (resident)
            pl.BlockSpec((d_in, HDK), lambda i: (0, 0)),      # wq (resident)
            pl.BlockSpec((d_in, HDK), lambda i: (0, 0)),      # wk
            pl.BlockSpec((d_in, HDV), lambda i: (0, 0)),      # wv
            pl.BlockSpec((HDV, HDV), lambda i: (0, 0)),       # w_fc
            pl.BlockSpec((1, HDV), lambda i: (0, 0)),         # b_fc
            pl.BlockSpec((1, HDV), lambda i: (0, 0)),         # gamma
            pl.BlockSpec((1, HDV), lambda i: (0, 0)),         # beta
        ],
        out_specs=(
            pl.BlockSpec((tb * modal, HDV + HDK), lambda i: (i, 0)),
            pl.BlockSpec((n_head, tb, modal, modal), lambda i: (0, i, 0, 0)),
        ),
        compiler_params=pltpu.CompilerParams(
            dimension_semantics=("parallel",),
            vmem_limit_bytes=32 * 1024 * 1024),
    )(x, mask, wq, wk, wv, wfc,
      b_fc.reshape(1, -1).astype(jnp.float32),
      gamma.reshape(1, -1).astype(jnp.float32),
      beta.reshape(1, -1).astype(jnp.float32))

    # Wrapper-side layout plumbing (tiny): split the packed slab, strip padding.
    outres = outres[:bs * modal]
    q_out = outres[:, :HDV].reshape(bs, modal, HDV)
    residual = outres[:, HDV:].reshape(bs, modal, HDK)
    attn = jnp.transpose(attn_hb, (1, 0, 2, 3))[:bs]          # (bs, H, M, M)
    return q_out, attn, residual


def _reference(input_data, w_qs, w_ks, w_vs, w_fc, b_fc, gamma, beta,
               *, dims, n_head, d_k, d_v):
    bs = input_data.shape[0]
    modal = len(dims)
    qs, ks, vs = [], [], []
    off = 0
    for i, d in enumerate(dims):
        data = input_data[:, off:off + d]
        off += d
        qs.append(data @ w_qs[i].T)
        ks.append(data @ w_ks[i].T)
        vs.append(data @ w_vs[i].T)
    q = jnp.stack(qs, axis=1).reshape(bs, modal, n_head, d_k).transpose(0, 2, 1, 3)
    k = jnp.stack(ks, axis=1).reshape(bs, modal, n_head, d_k).transpose(0, 2, 1, 3)
    v = jnp.stack(vs, axis=1).reshape(bs, modal, n_head, d_v).transpose(0, 2, 1, 3)
    attn = jnp.einsum('bhmd,bhnd->bhmn', q / (d_k ** 0.5), k)
    attn = attn / jnp.abs(jnp.min(attn))
    nrm = jnp.sqrt(jnp.sum(attn * attn, axis=-1, keepdims=True))
    attn = attn / jnp.maximum(nrm, 1e-12)
    attn = jax.nn.softmax(attn, axis=-1)
    o = jnp.einsum('bhmn,bhnd->bhmd', attn, v)
    o = o.transpose(0, 2, 1, 3).reshape(bs, modal, n_head * d_v)
    residual = q.transpose(0, 2, 1, 3).reshape(bs, modal, n_head * d_k)
    o = o @ w_fc.T + b_fc
    o = o + residual
    mean = o.mean(-1, keepdims=True)
    var = ((o - mean) ** 2).mean(-1, keepdims=True)
    o = (o - mean) / jnp.sqrt(var + 1e-6) * gamma + beta
    return o, attn, residual


if __name__ == "__main__":
    # Variable-length modalities (the point of the module), small shapes.
    dims = (8, 20, 12, 16, 6, 10, 14, 10)          # sum = 96
    bs = 2
    n_head, d_k, d_v = 4, 16, 16                   # residual add requires d_k == d_v
    modal = len(dims)
    d_in = sum(dims)

    key = jax.random.PRNGKey(0)
    k_in, k_fc, k_bfc, k_g, k_b, k_w = jax.random.split(key, 6)
    wkeys = jax.random.split(k_w, 3 * modal)

    input_data = jax.random.normal(k_in, (bs, d_in), jnp.float32)
    w_qs = [0.1 * jax.random.normal(wkeys[3 * i + 0], (n_head * d_k, d), jnp.float32)
            for i, d in enumerate(dims)]
    w_ks = [0.1 * jax.random.normal(wkeys[3 * i + 1], (n_head * d_k, d), jnp.float32)
            for i, d in enumerate(dims)]
    w_vs = [0.1 * jax.random.normal(wkeys[3 * i + 2], (n_head * d_v, d), jnp.float32)
            for i, d in enumerate(dims)]
    w_fc = 0.1 * jax.random.normal(k_fc, (n_head * d_v, n_head * d_v), jnp.float32)
    b_fc = 0.05 * jax.random.normal(k_bfc, (n_head * d_v,), jnp.float32)
    gamma = 1.0 + 0.1 * jax.random.normal(k_g, (n_head * d_v,), jnp.float32)
    beta = 0.1 * jax.random.normal(k_b, (n_head * d_v,), jnp.float32)

    ref_out, ref_attn, ref_res = _reference(
        input_data, w_qs, w_ks, w_vs, w_fc, b_fc, gamma, beta,
        dims=dims, n_head=n_head, d_k=d_k, d_v=d_v)

    # 1) f32 matmul operands: structural-correctness check.  Tolerances are
    #    bounded by f32-matmul pass differences between Mosaic and XLA's
    #    default (reduced-precision-operand) matmuls, not by kernel structure.
    out, attn, residual = vari_length_input_forward(
        input_data, w_qs, w_ks, w_vs, w_fc, b_fc, gamma, beta,
        dims=dims, n_head=n_head, d_k=d_k, d_v=d_v,
        matmul_dtype=jnp.float32)
    jax.block_until_ready((out, attn, residual))
    assert out.shape == (bs, modal, n_head * d_v)
    assert attn.shape == (bs, n_head, modal, modal)
    assert residual.shape == (bs, modal, n_head * d_k)
    assert float(jnp.max(jnp.abs(out - ref_out))) < 1e-2
    assert float(jnp.max(jnp.abs(attn - ref_attn))) < 5e-3
    assert float(jnp.max(jnp.abs(residual - ref_res))) < 1e-2

    # 2) bf16 matmul operands (f32 accumulation) — the performance
    #    configuration for v6e/v7x MXUs.  Tolerances reflect ~2^-9 relative
    #    operand rounding amplified by the final LayerNorm.
    out16, attn16, res16 = vari_length_input_forward(
        input_data, w_qs, w_ks, w_vs, w_fc, b_fc, gamma, beta,
        dims=dims, n_head=n_head, d_k=d_k, d_v=d_v,
        matmul_dtype=jnp.bfloat16)
    jax.block_until_ready((out16, attn16, res16))
    assert float(jnp.max(jnp.abs(out16 - ref_out))) < 4e-2
    assert float(jnp.max(jnp.abs(attn16 - ref_attn))) < 1.5e-2
    assert float(jnp.max(jnp.abs(res16 - ref_res))) < 1.5e-2

    print("KERNEL_OK")
</pallas_src>

<mosaic_0001>
module attributes {stable_mosaic.version = 11 : i64} {
  func.func @_vari_length_kernel(%arg0: i32, %arg1: memref<2x96xf32, #tpu.memory_space<vmem>>, %arg2: memref<8x96xf32, #tpu.memory_space<vmem>>, %arg3: memref<96x64xf32, #tpu.memory_space<vmem>>, %arg4: memref<96x64xf32, #tpu.memory_space<vmem>>, %arg5: memref<96x64xf32, #tpu.memory_space<vmem>>, %arg6: memref<64x64xf32, #tpu.memory_space<vmem>>, %arg7: memref<1x64xf32, #tpu.memory_space<vmem>>, %arg8: memref<1x64xf32, #tpu.memory_space<vmem>>, %arg9: memref<1x64xf32, #tpu.memory_space<vmem>>, %arg10: memref<16x128xf32, #tpu.memory_space<vmem>>, %arg11: memref<4x2x8x8xf32, #tpu.memory_space<vmem>>) attributes {dimension_semantics = [#tpu.dimension_semantics<parallel>], iteration_bounds = array<i64: 1>, scalar_prefetch = 0 : i64, scratch_operands = 0 : i64, tpu.core_type = #tpu.core_type<tc>, window_params = [{transform_indices = @transform_0, window_bounds = array<i64: 2, 96>}, {pipeline_mode = #tpu.pipeline_mode<synchronous>, transform_indices = @transform_1, window_bounds = array<i64: 8, 96>}, {pipeline_mode = #tpu.pipeline_mode<synchronous>, transform_indices = @transform_2, window_bounds = array<i64: 96, 64>}, {pipeline_mode = #tpu.pipeline_mode<synchronous>, transform_indices = @transform_3, window_bounds = array<i64: 96, 64>}, {pipeline_mode = #tpu.pipeline_mode<synchronous>, transform_indices = @transform_4, window_bounds = array<i64: 96, 64>}, {pipeline_mode = #tpu.pipeline_mode<synchronous>, transform_indices = @transform_5, window_bounds = array<i64: 64, 64>}, {pipeline_mode = #tpu.pipeline_mode<synchronous>, transform_indices = @transform_6, window_bounds = array<i64: 1, 64>}, {pipeline_mode = #tpu.pipeline_mode<synchronous>, transform_indices = @transform_7, window_bounds = array<i64: 1, 64>}, {pipeline_mode = #tpu.pipeline_mode<synchronous>, transform_indices = @transform_8, window_bounds = array<i64: 1, 64>}, {transform_indices = @transform_9, window_bounds = array<i64: 16, 128>}, {transform_indices = @transform_10, window_bounds = array<i64: 4, 2, 8, 8>}]} {
    %c0 = arith.constant 0 : index
    %c0_0 = arith.constant 0 : index
    %0 = vector.load %arg1[%c0, %c0_0] : memref<2x96xf32, #tpu.memory_space<vmem>>, vector<2x96xf32>
    %c0_1 = arith.constant 0 : index
    %c0_2 = arith.constant 0 : index
    %1 = vector.load %arg2[%c0_1, %c0_2] : memref<8x96xf32, #tpu.memory_space<vmem>>, vector<8x96xf32>
    %2 = vector.shape_cast %0 : vector<2x96xf32> to vector<2x1x96xf32>
    %3 = vector.shape_cast %1 : vector<8x96xf32> to vector<1x8x96xf32>
    %4 = vector.broadcast %2 : vector<2x1x96xf32> to vector<2x8x96xf32>
    %5 = vector.broadcast %3 : vector<1x8x96xf32> to vector<2x8x96xf32>
    %6 = arith.mulf %4, %5 : vector<2x8x96xf32>
    %7 = vector.shape_cast %6 : vector<2x8x96xf32> to vector<16x96xf32>
    %c0_3 = arith.constant 0 : index
    %c0_4 = arith.constant 0 : index
    %8 = vector.load %arg3[%c0_3, %c0_4] : memref<96x64xf32, #tpu.memory_space<vmem>>, vector<96x64xf32>
    %cst = arith.constant dense<0.000000e+00> : vector<16x64xf32>
    %9 = tpu.matmul %7, %8, %cst {dimension_numbers = #tpu.dot_dimension_numbers<[1], [0], [0], [1], [0, 0, 1, 1], [], []>} : vector<16x96xf32>, vector<96x64xf32>, vector<16x64xf32> -> vector<16x64xf32>
    %c0_5 = arith.constant 0 : index
    %c0_6 = arith.constant 0 : index
    %10 = vector.load %arg4[%c0_5, %c0_6] : memref<96x64xf32, #tpu.memory_space<vmem>>, vector<96x64xf32>
    %cst_7 = arith.constant dense<0.000000e+00> : vector<16x64xf32>
    %11 = tpu.matmul %7, %10, %cst_7 {dimension_numbers = #tpu.dot_dimension_numbers<[1], [0], [0], [1], [0, 0, 1, 1], [], []>} : vector<16x96xf32>, vector<96x64xf32>, vector<16x64xf32> -> vector<16x64xf32>
    %c0_8 = arith.constant 0 : index
    %c0_9 = arith.constant 0 : index
    %12 = vector.load %arg5[%c0_8, %c0_9] : memref<96x64xf32, #tpu.memory_space<vmem>>, vector<96x64xf32>
    %cst_10 = arith.constant dense<0.000000e+00> : vector<16x64xf32>
    %13 = tpu.matmul %7, %12, %cst_10 {dimension_numbers = #tpu.dot_dimension_numbers<[1], [0], [0], [1], [0, 0, 1, 1], [], []>} : vector<16x96xf32>, vector<96x64xf32>, vector<16x64xf32> -> vector<16x64xf32>
    %cst_11 = arith.constant 2.500000e-01 : f32
    %14 = vector.broadcast %cst_11 : f32 to vector<16x64xf32>
    %15 = arith.mulf %9, %14 : vector<16x64xf32>
    %16 = vector.extract_strided_slice %15 {offsets = [0, 0], sizes = [16, 16], strides = [1, 1]} : vector<16x64xf32> to vector<16x16xf32>
    %17 = vector.shape_cast %16 : vector<16x16xf32> to vector<2x8x16xf32>
    %18 = vector.extract_strided_slice %11 {offsets = [0, 0], sizes = [16, 16], strides = [1, 1]} : vector<16x64xf32> to vector<16x16xf32>
    %19 = vector.shape_cast %18 : vector<16x16xf32> to vector<2x8x16xf32>
    "tpu.trace_start"() <{level = 10 : i32, message = "bmd,bnd->bmn"}> : () -> ()
    %cst_12 = arith.constant dense<0.000000e+00> : vector<2x8x8xf32>
    %20 = tpu.matmul %17, %19, %cst_12 {dimension_numbers = #tpu.dot_dimension_numbers<[2], [2], [1], [1], [0, 0, 0, 1, 1, 1], [0], [0]>} : vector<2x8x16xf32>, vector<2x8x16xf32>, vector<2x8x8xf32> -> vector<2x8x8xf32>
    "tpu.trace_stop"() : () -> ()
    %21 = vector.extract_strided_slice %15 {offsets = [0, 16], sizes = [16, 16], strides = [1, 1]} : vector<16x64xf32> to vector<16x16xf32>
    %22 = vector.shape_cast %21 : vector<16x16xf32> to vector<2x8x16xf32>
    %23 = vector.extract_strided_slice %11 {offsets = [0, 16], sizes = [16, 16], strides = [1, 1]} : vector<16x64xf32> to vector<16x16xf32>
    %24 = vector.shape_cast %23 : vector<16x16xf32> to vector<2x8x16xf32>
    "tpu.trace_start"() <{level = 10 : i32, message = "bmd,bnd->bmn"}> : () -> ()
    %cst_13 = arith.constant dense<0.000000e+00> : vector<2x8x8xf32>
    %25 = tpu.matmul %22, %24, %cst_13 {dimension_numbers = #tpu.dot_dimension_numbers<[2], [2], [1], [1], [0, 0, 0, 1, 1, 1], [0], [0]>} : vector<2x8x16xf32>, vector<2x8x16xf32>, vector<2x8x8xf32> -> vector<2x8x8xf32>
    "tpu.trace_stop"() : () -> ()
    %26 = vector.extract_strided_slice %15 {offsets = [0, 32], sizes = [16, 16], strides = [1, 1]} : vector<16x64xf32> to vector<16x16xf32>
    %27 = vector.shape_cast %26 : vector<16x16xf32> to vector<2x8x16xf32>
    %28 = vector.extract_strided_slice %11 {offsets = [0, 32], sizes = [16, 16], strides = [1, 1]} : vector<16x64xf32> to vector<16x16xf32>
    %29 = vector.shape_cast %28 : vector<16x16xf32> to vector<2x8x16xf32>
    "tpu.trace_start"() <{level = 10 : i32, message = "bmd,bnd->bmn"}> : () -> ()
    %cst_14 = arith.constant dense<0.000000e+00> : vector<2x8x8xf32>
    %30 = tpu.matmul %27, %29, %cst_14 {dimension_numbers = #tpu.dot_dimension_numbers<[2], [2], [1], [1], [0, 0, 0, 1, 1, 1], [0], [0]>} : vector<2x8x16xf32>, vector<2x8x16xf32>, vector<2x8x8xf32> -> vector<2x8x8xf32>
    "tpu.trace_stop"() : () -> ()
    %31 = vector.extract_strided_slice %15 {offsets = [0, 48], sizes = [16, 16], strides = [1, 1]} : vector<16x64xf32> to vector<16x16xf32>
    %32 = vector.shape_cast %31 : vector<16x16xf32> to vector<2x8x16xf32>
    %33 = vector.extract_strided_slice %11 {offsets = [0, 48], sizes = [16, 16], strides = [1, 1]} : vector<16x64xf32> to vector<16x16xf32>
    %34 = vector.shape_cast %33 : vector<16x16xf32> to vector<2x8x16xf32>
    "tpu.trace_start"() <{level = 10 : i32, message = "bmd,bnd->bmn"}> : () -> ()
    %cst_15 = arith.constant dense<0.000000e+00> : vector<2x8x8xf32>
    %35 = tpu.matmul %32, %34, %cst_15 {dimension_numbers = #tpu.dot_dimension_numbers<[2], [2], [1], [1], [0, 0, 0, 1, 1, 1], [0], [0]>} : vector<2x8x16xf32>, vector<2x8x16xf32>, vector<2x8x8xf32> -> vector<2x8x8xf32>
    "tpu.trace_stop"() : () -> ()
    %36 = vector.shape_cast %20 : vector<2x8x8xf32> to vector<1x2x8x8xf32>
    %37 = vector.shape_cast %25 : vector<2x8x8xf32> to vector<1x2x8x8xf32>
    %38 = vector.shape_cast %30 : vector<2x8x8xf32> to vector<1x2x8x8xf32>
    %39 = vector.shape_cast %35 : vector<2x8x8xf32> to vector<1x2x8x8xf32>
    %40 = tpu.concatenate %36, %37, %38, %39 in 0 : vector<1x2x8x8xf32>, vector<1x2x8x8xf32>, vector<1x2x8x8xf32>, vector<1x2x8x8xf32> -> vector<4x2x8x8xf32>
    %41 = arith.mulf %40, %40 : vector<4x2x8x8xf32>
    %cst_16 = arith.constant dense<0.000000e+00> : vector<4x2x8xf32>
    %42 = vector.multi_reduction <add>, %41, %cst_16 [3] : vector<4x2x8x8xf32> to vector<4x2x8xf32>
    %43 = vector.shape_cast %42 : vector<4x2x8xf32> to vector<4x2x8x1xf32>
    %cst_17 = arith.constant 1.000000e-24 : f32
    %44 = vector.broadcast %cst_17 : f32 to vector<4x2x8x1xf32>
    %45 = arith.maximumf %43, %44 : vector<4x2x8x1xf32>
    %46 = math.rsqrt %45 : vector<4x2x8x1xf32>
    %47 = vector.broadcast %46 : vector<4x2x8x1xf32> to vector<4x2x8x8xf32>
    %48 = arith.mulf %40, %47 : vector<4x2x8x8xf32>
    %49 = math.exp %48 : vector<4x2x8x8xf32>
    %cst_18 = arith.constant dense<0.000000e+00> : vector<4x2x8xf32>
    %50 = vector.multi_reduction <add>, %49, %cst_18 [3] : vector<4x2x8x8xf32> to vector<4x2x8xf32>
    %51 = vector.shape_cast %50 : vector<4x2x8xf32> to vector<4x2x8x1xf32>
    %52 = tpu.reciprocal %51 {approx = true} : vector<4x2x8x1xf32> -> vector<4x2x8x1xf32>
    %53 = arith.mulf %51, %52 : vector<4x2x8x1xf32>
    %cst_19 = arith.constant 2.000000e+00 : f32
    %54 = vector.broadcast %cst_19 : f32 to vector<4x2x8x1xf32>
    %55 = arith.subf %54, %53 : vector<4x2x8x1xf32>
    %56 = arith.mulf %52, %55 : vector<4x2x8x1xf32>
    %57 = vector.broadcast %56 : vector<4x2x8x1xf32> to vector<4x2x8x8xf32>
    %58 = arith.mulf %49, %57 : vector<4x2x8x8xf32>
    %c0_20 = arith.constant 0 : index
    %c0_21 = arith.constant 0 : index
    %c0_22 = arith.constant 0 : index
    %c0_23 = arith.constant 0 : index
    %59 = vector.load %arg11[%c0_20, %c0_21, %c0_22, %c0_23] : memref<4x2x8x8xf32, #tpu.memory_space<vmem>>, vector<4x2x8x8xf32>
    tpu.vector_store %arg11[%c0_20, %c0_21, %c0_22, %c0_23], %58 {strides = array<i32>} : memref<4x2x8x8xf32, #tpu.memory_space<vmem>>, vector<4x2x8x8xf32>,
    %60 = vector.extract_strided_slice %58 {offsets = [0, 0, 0, 0], sizes = [1, 2, 8, 8], strides = [1, 1, 1, 1]} : vector<4x2x8x8xf32> to vector<1x2x8x8xf32>
    %61 = vector.shape_cast %60 : vector<1x2x8x8xf32> to vector<2x8x8xf32>
    %62 = vector.extract_strided_slice %13 {offsets = [0, 0], sizes = [16, 16], strides = [1, 1]} : vector<16x64xf32> to vector<16x16xf32>
    %63 = vector.shape_cast %62 : vector<16x16xf32> to vector<2x8x16xf32>
    "tpu.trace_start"() <{level = 10 : i32, message = "bmn,bnd->bmd"}> : () -> ()
    %cst_24 = arith.constant dense<0.000000e+00> : vector<2x8x16xf32>
    %64 = tpu.matmul %61, %63, %cst_24 {dimension_numbers = #tpu.dot_dimension_numbers<[2], [1], [1], [2], [0, 0, 0, 1, 1, 2], [0], [0]>} : vector<2x8x8xf32>, vector<2x8x16xf32>, vector<2x8x16xf32> -> vector<2x8x16xf32>
    "tpu.trace_stop"() : () -> ()
    %65 = vector.shape_cast %64 : vector<2x8x16xf32> to vector<16x16xf32>
    %66 = vector.extract_strided_slice %58 {offsets = [1, 0, 0, 0], sizes = [1, 2, 8, 8], strides = [1, 1, 1, 1]} : vector<4x2x8x8xf32> to vector<1x2x8x8xf32>
    %67 = vector.shape_cast %66 : vector<1x2x8x8xf32> to vector<2x8x8xf32>
    %68 = vector.extract_strided_slice %13 {offsets = [0, 16], sizes = [16, 16], strides = [1, 1]} : vector<16x64xf32> to vector<16x16xf32>
    %69 = vector.shape_cast %68 : vector<16x16xf32> to vector<2x8x16xf32>
    "tpu.trace_start"() <{level = 10 : i32, message = "bmn,bnd->bmd"}> : () -> ()
    %cst_25 = arith.constant dense<0.000000e+00> : vector<2x8x16xf32>
    %70 = tpu.matmul %67, %69, %cst_25 {dimension_numbers = #tpu.dot_dimension_numbers<[2], [1], [1], [2], [0, 0, 0, 1, 1, 2], [0], [0]>} : vector<2x8x8xf32>, vector<2x8x16xf32>, vector<2x8x16xf32> -> vector<2x8x16xf32>
    "tpu.trace_stop"() : () -> ()
    %71 = vector.shape_cast %70 : vector<2x8x16xf32> to vector<16x16xf32>
    %72 = vector.extract_strided_slice %58 {offsets = [2, 0, 0, 0], sizes = [1, 2, 8, 8], strides = [1, 1, 1, 1]} : vector<4x2x8x8xf32> to vector<1x2x8x8xf32>
    %73 = vector.shape_cast %72 : vector<1x2x8x8xf32> to vector<2x8x8xf32>
    %74 = vector.extract_strided_slice %13 {offsets = [0, 32], sizes = [16, 16], strides = [1, 1]} : vector<16x64xf32> to vector<16x16xf32>
    %75 = vector.shape_cast %74 : vector<16x16xf32> to vector<2x8x16xf32>
    "tpu.trace_start"() <{level = 10 : i32, message = "bmn,bnd->bmd"}> : () -> ()
    %cst_26 = arith.constant dense<0.000000e+00> : vector<2x8x16xf32>
    %76 = tpu.matmul %73, %75, %cst_26 {dimension_numbers = #tpu.dot_dimension_numbers<[2], [1], [1], [2], [0, 0, 0, 1, 1, 2], [0], [0]>} : vector<2x8x8xf32>, vector<2x8x16xf32>, vector<2x8x16xf32> -> vector<2x8x16xf32>
    "tpu.trace_stop"() : () -> ()
    %77 = vector.shape_cast %76 : vector<2x8x16xf32> to vector<16x16xf32>
    %78 = vector.extract_strided_slice %58 {offsets = [3, 0, 0, 0], sizes = [1, 2, 8, 8], strides = [1, 1, 1, 1]} : vector<4x2x8x8xf32> to vector<1x2x8x8xf32>
    %79 = vector.shape_cast %78 : vector<1x2x8x8xf32> to vector<2x8x8xf32>
    %80 = vector.extract_strided_slice %13 {offsets = [0, 48], sizes = [16, 16], strides = [1, 1]} : vector<16x64xf32> to vector<16x16xf32>
    %81 = vector.shape_cast %80 : vector<16x16xf32> to vector<2x8x16xf32>
    "tpu.trace_start"() <{level = 10 : i32, message = "bmn,bnd->bmd"}> : () -> ()
    %cst_27 = arith.constant dense<0.000000e+00> : vector<2x8x16xf32>
    %82 = tpu.matmul %79, %81, %cst_27 {dimension_numbers = #tpu.dot_dimension_numbers<[2], [1], [1], [2], [0, 0, 0, 1, 1, 2], [0], [0]>} : vector<2x8x8xf32>, vector<2x8x16xf32>, vector<2x8x16xf32> -> vector<2x8x16xf32>
    "tpu.trace_stop"() : () -> ()
    %83 = vector.shape_cast %82 : vector<2x8x16xf32> to vector<16x16xf32>
    %84 = tpu.concatenate %65, %71, %77, %83 in 1 : vector<16x16xf32>, vector<16x16xf32>, vector<16x16xf32>, vector<16x16xf32> -> vector<16x64xf32>
    %c0_28 = arith.constant 0 : index
    %c0_29 = arith.constant 0 : index
    %85 = vector.load %arg6[%c0_28, %c0_29] : memref<64x64xf32, #tpu.memory_space<vmem>>, vector<64x64xf32>
    %cst_30 = arith.constant dense<0.000000e+00> : vector<16x64xf32>
    %86 = tpu.matmul %84, %85, %cst_30 {dimension_numbers = #tpu.dot_dimension_numbers<[1], [0], [0], [1], [0, 0, 1, 1], [], []>} : vector<16x64xf32>, vector<64x64xf32>, vector<16x64xf32> -> vector<16x64xf32>
    %c0_31 = arith.constant 0 : index
    %c0_32 = arith.constant 0 : index
    %87 = vector.load %arg7[%c0_31, %c0_32] : memref<1x64xf32, #tpu.memory_space<vmem>>, vector<1x64xf32>
    %88 = vector.broadcast %87 : vector<1x64xf32> to vector<16x64xf32>
    %89 = arith.addf %86, %88 : vector<16x64xf32>
    %90 = arith.addf %89, %9 : vector<16x64xf32>
    %cst_33 = arith.constant dense<0.000000e+00> : vector<16xf32>
    %91 = vector.multi_reduction <add>, %90, %cst_33 [1] : vector<16x64xf32> to vector<16xf32>
    %92 = vector.shape_cast %91 : vector<16xf32> to vector<16x1xf32>
    %cst_34 = arith.constant 6.400000e+01 : f32
    %93 = vector.broadcast %cst_34 : f32 to vector<16x1xf32>
    %94 = arith.divf %92, %93 : vector<16x1xf32>
    %95 = vector.broadcast %94 : vector<16x1xf32> to vector<16x64xf32>
    %96 = arith.subf %90, %95 : vector<16x64xf32>
    %97 = arith.mulf %96, %96 : vector<16x64xf32>
    %cst_35 = arith.constant dense<0.000000e+00> : vector<16xf32>
    %98 = vector.multi_reduction <add>, %97, %cst_35 [1] : vector<16x64xf32> to vector<16xf32>
    %99 = vector.shape_cast %98 : vector<16xf32> to vector<16x1xf32>
    %cst_36 = arith.constant 6.400000e+01 : f32
    %100 = vector.broadcast %cst_36 : f32 to vector<16x1xf32>
    %101 = arith.divf %99, %100 : vector<16x1xf32>
    %cst_37 = arith.constant 9.99999997E-7 : f32
    %102 = vector.broadcast %cst_37 : f32 to vector<16x1xf32>
    %103 = arith.addf %101, %102 : vector<16x1xf32>
    %104 = math.rsqrt %103 : vector<16x1xf32>
    %105 = vector.broadcast %104 : vector<16x1xf32> to vector<16x64xf32>
    %106 = arith.mulf %96, %105 : vector<16x64xf32>
    %c0_38 = arith.constant 0 : index
    %c0_39 = arith.constant 0 : index
    %107 = vector.load %arg8[%c0_38, %c0_39] : memref<1x64xf32, #tpu.memory_space<vmem>>, vector<1x64xf32>
    %108 = vector.broadcast %107 : vector<1x64xf32> to vector<16x64xf32>
    %109 = arith.mulf %106, %108 : vector<16x64xf32>
    %c0_40 = arith.constant 0 : index
    %c0_41 = arith.constant 0 : index
    %110 = vector.load %arg9[%c0_40, %c0_41] : memref<1x64xf32, #tpu.memory_space<vmem>>, vector<1x64xf32>
    %111 = vector.broadcast %110 : vector<1x64xf32> to vector<16x64xf32>
    %112 = arith.addf %109, %111 : vector<16x64xf32>
    %113 = tpu.concatenate %112, %9 in 1 : vector<16x64xf32>, vector<16x64xf32> -> vector<16x128xf32>
    %c0_42 = arith.constant 0 : index
    %c0_43 = arith.constant 0 : index
    %114 = vector.load %arg10[%c0_42, %c0_43] : memref<16x128xf32, #tpu.memory_space<vmem>>, vector<16x128xf32>
    tpu.vector_store %arg10[%c0_42, %c0_43], %113 {strides = array<i32>} : memref<16x128xf32, #tpu.memory_space<vmem>>, vector<16x128xf32>,
    return
  }
  func.func @transform_0(%arg0: i32) -> (i32, i32) {
    %c0_i32 = arith.constant 0 : i32
    %c0_i32_0 = arith.constant 0 : i32
    return %arg0, %c0_i32 : i32, i32
  }
  func.func @transform_1(%arg0: i32) -> (i32, i32) {
    %c0_i32 = arith.constant 0 : i32
    %c0_i32_0 = arith.constant 0 : i32
    %c0_i32_1 = arith.constant 0 : i32
    return %c0_i32, %c0_i32_0 : i32, i32
  }
  func.func @transform_2(%arg0: i32) -> (i32, i32) {
    %c0_i32 = arith.constant 0 : i32
    %c0_i32_0 = arith.constant 0 : i32
    %c0_i32_1 = arith.constant 0 : i32
    return %c0_i32, %c0_i32_0 : i32, i32
  }
  func.func @transform_3(%arg0: i32) -> (i32, i32) {
    %c0_i32 = arith.constant 0 : i32
    %c0_i32_0 = arith.constant 0 : i32
    %c0_i32_1 = arith.constant 0 : i32
    return %c0_i32, %c0_i32_0 : i32, i32
  }
  func.func @transform_4(%arg0: i32) -> (i32, i32) {
    %c0_i32 = arith.constant 0 : i32
    %c0_i32_0 = arith.constant 0 : i32
    %c0_i32_1 = arith.constant 0 : i32
    return %c0_i32, %c0_i32_0 : i32, i32
  }
  func.func @transform_5(%arg0: i32) -> (i32, i32) {
    %c0_i32 = arith.constant 0 : i32
    %c0_i32_0 = arith.constant 0 : i32
    %c0_i32_1 = arith.constant 0 : i32
    return %c0_i32, %c0_i32_0 : i32, i32
  }
  func.func @transform_6(%arg0: i32) -> (i32, i32) {
    %c0_i32 = arith.constant 0 : i32
    %c0_i32_0 = arith.constant 0 : i32
    %c0_i32_1 = arith.constant 0 : i32
    return %c0_i32, %c0_i32_0 : i32, i32
  }
  func.func @transform_7(%arg0: i32) -> (i32, i32) {
    %c0_i32 = arith.constant 0 : i32
    %c0_i32_0 = arith.constant 0 : i32
    %c0_i32_1 = arith.constant 0 : i32
    return %c0_i32, %c0_i32_0 : i32, i32
  }
  func.func @transform_8(%arg0: i32) -> (i32, i32) {
    %c0_i32 = arith.constant 0 : i32
    %c0_i32_0 = arith.constant 0 : i32
    %c0_i32_1 = arith.constant 0 : i32
    return %c0_i32, %c0_i32_0 : i32, i32
  }
  func.func @transform_9(%arg0: i32) -> (i32, i32) {
    %c0_i32 = arith.constant 0 : i32
    %c0_i32_0 = arith.constant 0 : i32
    return %arg0, %c0_i32 : i32, i32
  }
  func.func @transform_10(%arg0: i32) -> (i32, i32, i32, i32) {
    %c0_i32 = arith.constant 0 : i32
    %c0_i32_0 = arith.constant 0 : i32
    %c0_i32_1 = arith.constant 0 : i32
    %c0_i32_2 = arith.constant 0 : i32
    return %c0_i32, %arg0, %c0_i32_0, %c0_i32_1 : i32, i32, i32, i32
  }
}

</mosaic_0001>

<llo_original>
// kernel: tpu_custom_call.1
$region0: #{tpu_custom_call.1}
  #allocation0 [shape = 'u32[]', space=smem, size = 0x4, offset = 0x4, fixed_abs, tag = 'smem constant byte address 0x4 - core index']
  #allocation1 [shape = 'u32[144,128]{1,0:T(1,128)}', space=vmem, size = 0x12000, scoped, tag = 'internal scratch']
  %s0 = inlined_call_operand.vmem [shape: f32[2,96], index: 0, kind: input, shape index: {}]
  %s1 = inlined_call_operand.vmem [shape: f32[8,96], index: 1, kind: input, shape index: {}]
  %s2 = inlined_call_operand.vmem [shape: f32[96,64], index: 2, kind: input, shape index: {}]
  %s3 = inlined_call_operand.vmem [shape: f32[96,64], index: 3, kind: input, shape index: {}]
  %s4 = inlined_call_operand.vmem [shape: f32[96,64], index: 4, kind: input, shape index: {}]
  %s5 = inlined_call_operand.vmem [shape: f32[64,64], index: 5, kind: input, shape index: {}]
  %s6 = inlined_call_operand.vmem [shape: f32[1,64], index: 6, kind: input, shape index: {}]
  %s7 = inlined_call_operand.vmem [shape: f32[1,64], index: 7, kind: input, shape index: {}]
  %s8 = inlined_call_operand.vmem [shape: f32[1,64], index: 8, kind: input, shape index: {}]
  %s9 = inlined_call_operand.hbm [shape: f32[16,128], index: 9, kind: output, shape index: {0}]
  %s10 = inlined_call_operand.hbm [shape: f32[4,2,8,8], index: 10, kind: output, shape index: {1}]
  %11 = xla_tuple %s9, %s10
  %s12 = sld [smem:[#allocation0]]
  $region54: #{tpu_custom_call.1} parent=0
    _
  %s14 = ssub.s32 1, %s12
  %s15 = scalar_select 0, %s14, %s12
  $region1: #{tpu_custom_call.1} parent=0
    #allocation2 [shape = 'u8[8192]{0}', space=vmem, size = 0x2000, scoped, tag = 'output window, operand 0, single buffered']
    #allocation3 [shape = 's32[1]{0}', space=sflag, size = 0x4, scoped, tag = 'scoped memory for tpu_custom_call.1']
    #allocation4 [shape = 'u8[32768]{0}', space=vmem, size = 0x8000, scoped, tag = 'output window, operand 1, single buffered']
    #allocation5 [shape = 's32[1]{0}', space=sflag, size = 0x4, scoped, tag = 'scoped memory for tpu_custom_call.1']
    %16 = vsyncpa [#allocation3], 0
    %17 = vsyncpa [#allocation5], 0
    // Predicated region
    $region2: #{tpu_custom_call.1} parent=1 // pred_check
      _
    $region3: #{tpu_custom_call.1} parent=1 // pred_check_branch
      %19 = sbr.rel (0) target = $region5
    $region4: #{tpu_custom_call.1} parent=1 // pred_region
      _
    $region5: #{tpu_custom_call.1} parent=1 // pred_fallthru
      _
    // Predicated region
    $region6: #{tpu_custom_call.1} parent=1 // pred_check
      _
    $region7: #{tpu_custom_call.1} parent=1 // pred_check_branch
      %21 = sbr.rel (0) target = $region9
    $region8: #{tpu_custom_call.1} parent=1 // pred_region
      _
    $region9: #{tpu_custom_call.1} parent=1 // pred_fallthru
      _
    // Predicated region
    $region10: #{tpu_custom_call.1} parent=1 // pred_check
      _
    $region11: #{tpu_custom_call.1} parent=1 // pred_check_branch
      %23 = sbr.rel (0) target = $region13
    $region12: #{tpu_custom_call.1} parent=1 // pred_region
      _
    $region13: #{tpu_custom_call.1} parent=1 // pred_fallthru
      _
    // Predicated region
    $region14: #{tpu_custom_call.1} parent=1 // pred_check
      _
    $region15: #{tpu_custom_call.1} parent=1 // pred_check_branch
      %25 = sbr.rel (0) target = $region17
    $region16: #{tpu_custom_call.1} parent=1 // pred_region
      _
    $region17: #{tpu_custom_call.1} parent=1 // pred_fallthru
      _
    // Predicated region
    $region18: #{tpu_custom_call.1} parent=1 // pred_check
      _
    $region19: #{tpu_custom_call.1} parent=1 // pred_check_branch
      %27 = sbr.rel (0) target = $region21
    $region20: #{tpu_custom_call.1} parent=1 // pred_region
      _
    $region21: #{tpu_custom_call.1} parent=1 // pred_fallthru
      _
    // Predicated region
    $region22: #{tpu_custom_call.1} parent=1 // pred_check
      _
    $region23: #{tpu_custom_call.1} parent=1 // pred_check_branch
      %29 = sbr.rel (0) target = $region25
    $region24: #{tpu_custom_call.1} parent=1 // pred_region
      _
    $region25: #{tpu_custom_call.1} parent=1 // pred_fallthru
      _
    // Predicated region
    $region26: #{tpu_custom_call.1} parent=1 // pred_check
      _
    $region27: #{tpu_custom_call.1} parent=1 // pred_check_branch
      %31 = sbr.rel (0) target = $region29
    $region28: #{tpu_custom_call.1} parent=1 // pred_region
      _
    $region29: #{tpu_custom_call.1} parent=1 // pred_fallthru
      _
    // Predicated region
    $region30: #{tpu_custom_call.1} parent=1 // pred_check
      _
    $region31: #{tpu_custom_call.1} parent=1 // pred_check_branch
      %33 = sbr.rel (0) target = $region33
    $region32: #{tpu_custom_call.1} parent=1 // pred_region
      _
    $region33: #{tpu_custom_call.1} parent=1 // pred_fallthru
      _
    // Predicated region
    $region34: #{tpu_custom_call.1} parent=1 // pred_check
      _
    $region35: #{tpu_custom_call.1} parent=1 // pred_check_branch
      %35 = sbr.rel (0) target = $region37
    $region36: #{tpu_custom_call.1} parent=1 // pred_region
      _
    $region37: #{tpu_custom_call.1} parent=1 // pred_fallthru
      _
    %v36 = vld [vmem:[%s0] sm:$0x3]
    %v37 = vld [vmem:[%s1] sm:$0xff]
    %v40 = vunpack.c.l.s4 1966171168
    %v41 = vunpack.c.0.s8 %v40
    %v42 = vlaneseq
    %v43 = vshrl.u32 %v42, 7
    %v44 = vsub.s32 %v41, %v43
    %v45 = vrot.slane %v36, %v44
    %v46 = vcombine.high %v45, %v45
    %v48 = vunpack.c.l.s4 1966171168
    %v49 = vunpack.c.0.s8 %v48
    %v50 = vlaneseq
    %v51 = vshrl.u32 %v50, 7
    %v52 = vsub.s32 %v49, %v51
    %v53 = vrot.slane %v45, %v52
    %v55 = vunpack.c.l.s4 1966171168
    %v56 = vunpack.c.0.s8 %v55
    %v57 = vlaneseq
    %v58 = vshrl.u32 %v57, 7
    %v59 = vsub.s32 %v56, %v58
    %v60 = vrot.slane %v46, %v59
    %v61 = vlaneseq
    %v62 = vshrl.u32 %v61, 7
    %v63 = vsub.s32 0, %v62
    %v64 = vrot.slane %v53, %v63
    %v65 = vlaneseq
    %v66 = vshrl.u32 %v65, 7
    %v67 = vsub.s32 0, %v66
    %v68 = vrot.slane %v60, %v67
    %v71 = vmul.f32 %v64, %v37
    %v72 = vmul.f32 %v68, %v37
    %v73 = vld [vmem:[%s2] sm:$0xff]
    %v74 = vld [vmem:[%s2 + $0x8] sm:$0xff]
    %v75 = vld [vmem:[%s2 + $0x10] sm:$0xff]
    %v76 = vld [vmem:[%s2 + $0x18] sm:$0xff]
    %v77 = vld [vmem:[%s2 + $0x20] sm:$0xff]
    %v78 = vld [vmem:[%s2 + $0x28] sm:$0xff]
    %v79 = vld [vmem:[%s2 + $0x30] sm:$0xff]
    %v80 = vld [vmem:[%s2 + $0x38] sm:$0xff]
    %v81 = vld [vmem:[%s2 + $0x40] sm:$0xff]
    %v82 = vld [vmem:[%s2 + $0x48] sm:$0xff]
    %v83 = vld [vmem:[%s2 + $0x50] sm:$0xff]
    %v84 = vld [vmem:[%s2 + $0x58] sm:$0xff]
    %vm85 = vcmask 785408
    %v87 = vsel %vm85, %v71, 0
    %v90 = vsel %vm85, %v72, 0
    %92 = vmatprep.subr.mxu0 0.0
    %93 = vmatpush1.msra.mxu0 %v73
    %94 = vmatprep.subr.mxu0 0.0
    %95 = vmatpush1.msra.mxu0 %v74
    %96 = vmatprep.subr.mxu0 0.0
    %97 = vmatpush1.msra.mxu0 %v75
    %98 = vmatprep.subr.mxu0 0.0
    %99 = vmatpush1.msra.mxu0 %v76
    %100 = vmatprep.subr.mxu0 0.0
    %101 = vmatpush1.msra.mxu0 %v77
    %102 = vmatprep.subr.mxu0 0.0
    %103 = vmatpush1.msra.mxu0 %v78
    %104 = vmatprep.subr.mxu0 0.0
    %105 = vmatpush1.msra.mxu0 %v79
    %106 = vmatprep.subr.mxu0 0.0
    %107 = vmatpush1.msra.mxu0 %v80
    %108 = vmatprep.subr.mxu0 0.0
    %109 = vmatpush1.msra.mxu0 %v81
    %110 = vmatprep.subr.mxu0 0.0
    %111 = vmatpush1.msra.mxu0 %v82
    %112 = vmatprep.subr.mxu0 0.0
    %113 = vmatpush1.msra.mxu0 %v83
    %114 = vmatprep.subr.mxu0 0.0
    %115 = vmatpush1.msra.mxu0 %v84
    %116 = vmatprep.subr.mxu0 0.0
    %117 = vmatpush1.msra.mxu0 0.0
    %118 = vmatprep.subr.mxu0 0.0
    %119 = vmatpush1.msra.mxu0 0.0
    %120 = vmatprep.subr.mxu0 0.0
    %121 = vmatpush1.msra.mxu0 0.0
    %122 = vmatprep.subr.mxu0 0.0
    %123 = vmatpush1.msra.mxu0 0.0
    %124 = vmatprep.subr.mxu0 0.0
    %125 = vmatpush1.msra.mxu0 0.0
    %126 = vmatprep.subr.mxu0 0.0
    %127 = vmatpush1.msra.mxu0 0.0
    %128 = vmatprep.subr.mxu0 0.0
    %129 = vmatpush1.msra.mxu0 0.0
    %130 = vmatprep.subr.mxu0 0.0
    %131 = vmatpush1.msra.mxu0 0.0
    %132 = vmatprep.subr.mxu0 0.0
    %133 = vmatpush1.msra.mxu0 0.0
    %134 = vmatprep.subr.mxu0 0.0
    %135 = vmatpush1.msra.mxu0 0.0
    %136 = vmatprep.subr.mxu0 0.0
    %137 = vmatpush1.msra.mxu0 0.0
    %138 = vmatprep.subr.mxu0 0.0
    %139 = vmatpush1.msra.mxu0 0.0
    %140 = vmatprep.subr.mxu0 0.0
    %141 = vmatpush1.msra.mxu0 0.0
    %142 = vmatprep.subr.mxu0 0.0
    %143 = vmatpush1.msra.mxu0 0.0
    %144 = vmatprep.subr.mxu0 0.0
    %145 = vmatpush1.msra.mxu0 0.0
    %146 = vmatprep.subr.mxu0 0.0
    %147 = vmatpush1.msra.mxu0 0.0
    %148 = vmatprep.subr.mxu0 0.0
    %149 = vmatpush1.msra.mxu0 0.0
    %150 = vmatprep.subr.mxu0 0.0
    %151 = vmatpush1.msra.mxu0 0.0
    %152 = vmatprep.subr.mxu0 0.0
    %153 = vmatpush1.msra.mxu0 0.0
    %154 = vmatprep.subr.mxu0 0.0
    %155 = vmatpush1.msra.mxu0 0.0
    %156 = vmatprep.mubr.f32.mxu0 0.0
    %157 = vmatmul.mubr.f32.gmra.mrb[0].mxu0 %v87
    %v158 = vpop.f32.mrb[0].mxu0
    %v159 = vadd.f32 0.0, %v158
    %v160 = vpop.f32.mrb[0].mxu0
    %161 = vmatprep.mubr.f32.mxu0 0.0
    %162 = vmatmul.mubr.f32.gmra.mrb[0].mxu0 %v90
    %v163 = vpop.f32.mrb[0].mxu0
    %v164 = vadd.f32 0.0, %v163
    %v165 = vpop.f32.mrb[0].mxu0
    %166 = vdwg.mxu0
    %v167 = vld [vmem:[%s3] sm:$0xff]
    %v168 = vld [vmem:[%s3 + $0x8] sm:$0xff]
    %v169 = vld [vmem:[%s3 + $0x10] sm:$0xff]
    %v170 = vld [vmem:[%s3 + $0x18] sm:$0xff]
    %v171 = vld [vmem:[%s3 + $0x20] sm:$0xff]
    %v172 = vld [vmem:[%s3 + $0x28] sm:$0xff]
    %v173 = vld [vmem:[%s3 + $0x30] sm:$0xff]
    %v174 = vld [vmem:[%s3 + $0x38] sm:$0xff]
    %v175 = vld [vmem:[%s3 + $0x40] sm:$0xff]
    %v176 = vld [vmem:[%s3 + $0x48] sm:$0xff]
    %v177 = vld [vmem:[%s3 + $0x50] sm:$0xff]
    %v178 = vld [vmem:[%s3 + $0x58] sm:$0xff]
    %179 = vmatprep.subr.mxu0 0.0
    %180 = vmatpush1.msra.mxu0 %v167
    %181 = vmatprep.subr.mxu0 0.0
    %182 = vmatpush1.msra.mxu0 %v168
    %183 = vmatprep.subr.mxu0 0.0
    %184 = vmatpush1.msra.mxu0 %v169
    %185 = vmatprep.subr.mxu0 0.0
    %186 = vmatpush1.msra.mxu0 %v170
    %187 = vmatprep.subr.mxu0 0.0
    %188 = vmatpush1.msra.mxu0 %v171
    %189 = vmatprep.subr.mxu0 0.0
    %190 = vmatpush1.msra.mxu0 %v172
    %191 = vmatprep.subr.mxu0 0.0
    %192 = vmatpush1.msra.mxu0 %v173
    %193 = vmatprep.subr.mxu0 0.0
    %194 = vmatpush1.msra.mxu0 %v174
    %195 = vmatprep.subr.mxu0 0.0
    %196 = vmatpush1.msra.mxu0 %v175
    %197 = vmatprep.subr.mxu0 0.0
    %198 = vmatpush1.msra.mxu0 %v176
    %199 = vmatprep.subr.mxu0 0.0
    %200 = vmatpush1.msra.mxu0 %v177
    %201 = vmatprep.subr.mxu0 0.0
    %202 = vmatpush1.msra.mxu0 %v178
    %203 = vmatprep.subr.mxu0 0.0
    %204 = vmatpush1.msra.mxu0 0.0
    %205 = vmatprep.subr.mxu0 0.0
    %206 = vmatpush1.msra.mxu0 0.0
    %207 = vmatprep.subr.mxu0 0.0
    %208 = vmatpush1.msra.mxu0 0.0
    %209 = vmatprep.subr.mxu0 0.0
    %210 = vmatpush1.msra.mxu0 0.0
    %211 = vmatprep.subr.mxu0 0.0
    %212 = vmatpush1.msra.mxu0 0.0
    %213 = vmatprep.subr.mxu0 0.0
    %214 = vmatpush1.msra.mxu0 0.0
    %215 = vmatprep.subr.mxu0 0.0
    %216 = vmatpush1.msra.mxu0 0.0
    %217 = vmatprep.subr.mxu0 0.0
    %218 = vmatpush1.msra.mxu0 0.0
    %219 = vmatprep.subr.mxu0 0.0
    %220 = vmatpush1.msra.mxu0 0.0
    %221 = vmatprep.subr.mxu0 0.0
    %222 = vmatpush1.msra.mxu0 0.0
    %223 = vmatprep.subr.mxu0 0.0
    %224 = vmatpush1.msra.mxu0 0.0
    %225 = vmatprep.subr.mxu0 0.0
    %226 = vmatpush1.msra.mxu0 0.0
    %227 = vmatprep.subr.mxu0 0.0
    %228 = vmatpush1.msra.mxu0 0.0
    %229 = vmatprep.subr.mxu0 0.0
    %230 = vmatpush1.msra.mxu0 0.0
    %231 = vmatprep.subr.mxu0 0.0
    %232 = vmatpush1.msra.mxu0 0.0
    %233 = vmatprep.subr.mxu0 0.0
    %234 = vmatpush1.msra.mxu0 0.0
    %235 = vmatprep.subr.mxu0 0.0
    %236 = vmatpush1.msra.mxu0 0.0
    %237 = vmatprep.subr.mxu0 0.0
    %238 = vmatpush1.msra.mxu0 0.0
    %239 = vmatprep.subr.mxu0 0.0
    %240 = vmatpush1.msra.mxu0 0.0
    %241 = vmatprep.subr.mxu0 0.0
    %242 = vmatpush1.msra.mxu0 0.0
    %243 = vmatprep.mubr.f32.mxu0 0.0
    %244 = vmatmul.mubr.f32.gmra.mrb[0].mxu0 %v87
    %v245 = vpop.f32.mrb[0].mxu0
    %v246 = vadd.f32 0.0, %v245
    %v247 = vpop.f32.mrb[0].mxu0
    %248 = vmatprep.mubr.f32.mxu0 0.0
    %249 = vmatmul.mubr.f32.gmra.mrb[0].mxu0 %v90
    %v250 = vpop.f32.mrb[0].mxu0
    %v251 = vadd.f32 0.0, %v250
    %v252 = vpop.f32.mrb[0].mxu0
    %253 = vdwg.mxu0
    %v254 = vld [vmem:[%s4] sm:$0xff]
    %v255 = vld [vmem:[%s4 + $0x8] sm:$0xff]
    %v256 = vld [vmem:[%s4 + $0x10] sm:$0xff]
    %v257 = vld [vmem:[%s4 + $0x18] sm:$0xff]
    %v258 = vld [vmem:[%s4 + $0x20] sm:$0xff]
    %v259 = vld [vmem:[%s4 + $0x28] sm:$0xff]
    %v260 = vld [vmem:[%s4 + $0x30] sm:$0xff]
    %v261 = vld [vmem:[%s4 + $0x38] sm:$0xff]
    %v262 = vld [vmem:[%s4 + $0x40] sm:$0xff]
    %v263 = vld [vmem:[%s4 + $0x48] sm:$0xff]
    %v264 = vld [vmem:[%s4 + $0x50] sm:$0xff]
    %v265 = vld [vmem:[%s4 + $0x58] sm:$0xff]
    %266 = vmatprep.subr.mxu0 0.0
    %267 = vmatpush1.msra.mxu0 %v254
    %268 = vmatprep.subr.mxu0 0.0
    %269 = vmatpush1.msra.mxu0 %v255
    %270 = vmatprep.subr.mxu0 0.0
    %271 = vmatpush1.msra.mxu0 %v256
    %272 = vmatprep.subr.mxu0 0.0
    %273 = vmatpush1.msra.mxu0 %v257
    %274 = vmatprep.subr.mxu0 0.0
    %275 = vmatpush1.msra.mxu0 %v258
    %276 = vmatprep.subr.mxu0 0.0
    %277 = vmatpush1.msra.mxu0 %v259
    %278 = vmatprep.subr.mxu0 0.0
    %279 = vmatpush1.msra.mxu0 %v260
    %280 = vmatprep.subr.mxu0 0.0
    %281 = vmatpush1.msra.mxu0 %v261
    %282 = vmatprep.subr.mxu0 0.0
    %283 = vmatpush1.msra.mxu0 %v262
    %284 = vmatprep.subr.mxu0 0.0
    %285 = vmatpush1.msra.mxu0 %v263
    %286 = vmatprep.subr.mxu0 0.0
    %287 = vmatpush1.msra.mxu0 %v264
    %288 = vmatprep.subr.mxu0 0.0
    %289 = vmatpush1.msra.mxu0 %v265
    %290 = vmatprep.subr.mxu0 0.0
    %291 = vmatpush1.msra.mxu0 0.0
    %292 = vmatprep.subr.mxu0 0.0
    %293 = vmatpush1.msra.mxu0 0.0
    %294 = vmatprep.subr.mxu0 0.0
    %295 = vmatpush1.msra.mxu0 0.0
    %296 = vmatprep.subr.mxu0 0.0
    %297 = vmatpush1.msra.mxu0 0.0
    %298 = vmatprep.subr.mxu0 0.0
    %299 = vmatpush1.msra.mxu0 0.0
    %300 = vmatprep.subr.mxu0 0.0
    %301 = vmatpush1.msra.mxu0 0.0
    %302 = vmatprep.subr.mxu0 0.0
    %303 = vmatpush1.msra.mxu0 0.0
    %304 = vmatprep.subr.mxu0 0.0
    %305 = vmatpush1.msra.mxu0 0.0
    %306 = vmatprep.subr.mxu0 0.0
    %307 = vmatpush1.msra.mxu0 0.0
    %308 = vmatprep.subr.mxu0 0.0
    %309 = vmatpush1.msra.mxu0 0.0
    %310 = vmatprep.subr.mxu0 0.0
    %311 = vmatpush1.msra.mxu0 0.0
    %312 = vmatprep.subr.mxu0 0.0
    %313 = vmatpush1.msra.mxu0 0.0
    %314 = vmatprep.subr.mxu0 0.0
    %315 = vmatpush1.msra.mxu0 0.0
    %316 = vmatprep.subr.mxu0 0.0
    %317 = vmatpush1.msra.mxu0 0.0
    %318 = vmatprep.subr.mxu0 0.0
    %319 = vmatpush1.msra.mxu0 0.0
    %320 = vmatprep.subr.mxu0 0.0
    %321 = vmatpush1.msra.mxu0 0.0
    %322 = vmatprep.subr.mxu0 0.0
    %323 = vmatpush1.msra.mxu0 0.0
    %324 = vmatprep.subr.mxu0 0.0
    %325 = vmatpush1.msra.mxu0 0.0
    %326 = vmatprep.subr.mxu0 0.0
    %327 = vmatpush1.msra.mxu0 0.0
    %328 = vmatprep.subr.mxu0 0.0
    %329 = vmatpush1.msra.mxu0 0.0
    %330 = vmatprep.mubr.f32.mxu0 0.0
    %331 = vmatmul.mubr.f32.gmra.mrb[0].mxu0 %v87
    %v332 = vpop.f32.mrb[0].mxu0
    %v333 = vadd.f32 0.0, %v332
    %v334 = vpop.f32.mrb[0].mxu0
    %335 = vmatprep.mubr.f32.mxu0 0.0
    %336 = vmatmul.mubr.f32.gmra.mrb[0].mxu0 %v90
    %v337 = vpop.f32.mrb[0].mxu0
    %v338 = vadd.f32 0.0, %v337
    %v339 = vpop.f32.mrb[0].mxu0
    %340 = vdwg.mxu0
    %v341 = vmul.f32 %v159, 0.25
    %v342 = vmul.f32 %v164, 0.25
    %vm343 = vcmask 130048
    %v345 = vsel %vm343, %v341, 0
    %v348 = vsel %vm343, %v246, 0
    %350 = vmatprep.subr.mxu0 0.0
    %351 = vmatpush1.xpose.msra.mxu0 %v348
    %352 = vmatprep.subr.mxu0 0.0
    %353 = vmatpush1.xpose.msra.mxu0 0.0
    %354 = vmatprep.subr.mxu0 0.0
    %355 = vmatpush1.xpose.msra.mxu0 0.0
    %356 = vmatprep.subr.mxu0 0.0
    %357 = vmatpush1.xpose.msra.mxu0 0.0
    %358 = vmatprep.subr.mxu0 0.0
    %359 = vmatpush1.xpose.msra.mxu0 0.0
    %360 = vmatprep.subr.mxu0 0.0
    %361 = vmatpush1.xpose.msra.mxu0 0.0
    %362 = vmatprep.subr.mxu0 0.0
    %363 = vmatpush1.xpose.msra.mxu0 0.0
    %364 = vmatprep.subr.mxu0 0.0
    %365 = vmatpush1.xpose.msra.mxu0 0.0
    %366 = vmatprep.subr.mxu0 0.0
    %367 = vmatpush1.xpose.msra.mxu0 0.0
    %368 = vmatprep.subr.mxu0 0.0
    %369 = vmatpush1.xpose.msra.mxu0 0.0
    %370 = vmatprep.subr.mxu0 0.0
    %371 = vmatpush1.xpose.msra.mxu0 0.0
    %372 = vmatprep.subr.mxu0 0.0
    %373 = vmatpush1.xpose.msra.mxu0 0.0
    %374 = vmatprep.subr.mxu0 0.0
    %375 = vmatpush1.xpose.msra.mxu0 0.0
    %376 = vmatprep.subr.mxu0 0.0
    %377 = vmatpush1.xpose.msra.mxu0 0.0
    %378 = vmatprep.subr.mxu0 0.0
    %379 = vmatpush1.xpose.msra.mxu0 0.0
    %380 = vmatprep.subr.mxu0 0.0
    %381 = vmatpush1.xpose.msra.mxu0 0.0
    %382 = vmatprep.subr.mxu0 0.0
    %383 = vmatpush1.xpose.msra.mxu0 0.0
    %384 = vmatprep.subr.mxu0 0.0
    %385 = vmatpush1.xpose.msra.mxu0 0.0
    %386 = vmatprep.subr.mxu0 0.0
    %387 = vmatpush1.xpose.msra.mxu0 0.0
    %388 = vmatprep.subr.mxu0 0.0
    %389 = vmatpush1.xpose.msra.mxu0 0.0
    %390 = vmatprep.subr.mxu0 0.0
    %391 = vmatpush1.xpose.msra.mxu0 0.0
    %392 = vmatprep.subr.mxu0 0.0
    %393 = vmatpush1.xpose.msra.mxu0 0.0
    %394 = vmatprep.subr.mxu0 0.0
    %395 = vmatpush1.xpose.msra.mxu0 0.0
    %396 = vmatprep.subr.mxu0 0.0
    %397 = vmatpush1.xpose.msra.mxu0 0.0
    %398 = vmatprep.subr.mxu0 0.0
    %399 = vmatpush1.xpose.msra.mxu0 0.0
    %400 = vmatprep.subr.mxu0 0.0
    %401 = vmatpush1.xpose.msra.mxu0 0.0
    %402 = vmatprep.subr.mxu0 0.0
    %403 = vmatpush1.xpose.msra.mxu0 0.0
    %404 = vmatprep.subr.mxu0 0.0
    %405 = vmatpush1.xpose.msra.mxu0 0.0
    %406 = vmatprep.subr.mxu0 0.0
    %407 = vmatpush1.xpose.msra.mxu0 0.0
    %408 = vmatprep.subr.mxu0 0.0
    %409 = vmatpush1.xpose.msra.mxu0 0.0
    %410 = vmatprep.subr.mxu0 0.0
    %411 = vmatpush1.xpose.msra.mxu0 0.0
    %412 = vmatprep.subr.mxu0 0.0
    %413 = vmatpush1.xpose.msra.mxu0 0.0
    %414 = vmatprep.mubr.f32.mxu0 0.0
    %415 = vmatmul.mubr.f32.gmra.mrb[0].mxu0 %v345
    %v416 = vpop.f32.mrb[0].mxu0
    %v417 = vadd.f32 0.0, %v416
    %v418 = vpop.f32.mrb[0].mxu0
    %419 = vdwg.mxu0
    %v421 = vsel %vm343, %v342, 0
    %v424 = vsel %vm343, %v251, 0
    %426 = vmatprep.subr.mxu0 0.0
    %427 = vmatpush1.xpose.msra.mxu0 %v424
    %428 = vmatprep.subr.mxu0 0.0
    %429 = vmatpush1.xpose.msra.mxu0 0.0
    %430 = vmatprep.subr.mxu0 0.0
    %431 = vmatpush1.xpose.msra.mxu0 0.0
    %432 = vmatprep.subr.mxu0 0.0
    %433 = vmatpush1.xpose.msra.mxu0 0.0
    %434 = vmatprep.subr.mxu0 0.0
    %435 = vmatpush1.xpose.msra.mxu0 0.0
    %436 = vmatprep.subr.mxu0 0.0
    %437 = vmatpush1.xpose.msra.mxu0 0.0
    %438 = vmatprep.subr.mxu0 0.0
    %439 = vmatpush1.xpose.msra.mxu0 0.0
    %440 = vmatprep.subr.mxu0 0.0
    %441 = vmatpush1.xpose.msra.mxu0 0.0
    %442 = vmatprep.subr.mxu0 0.0
    %443 = vmatpush1.xpose.msra.mxu0 0.0
    %444 = vmatprep.subr.mxu0 0.0
    %445 = vmatpush1.xpose.msra.mxu0 0.0
    %446 = vmatprep.subr.mxu0 0.0
    %447 = vmatpush1.xpose.msra.mxu0 0.0
    %448 = vmatprep.subr.mxu0 0.0
    %449 = vmatpush1.xpose.msra.mxu0 0.0
    %450 = vmatprep.subr.mxu0 0.0
    %451 = vmatpush1.xpose.msra.mxu0 0.0
    %452 = vmatprep.subr.mxu0 0.0
    %453 = vmatpush1.xpose.msra.mxu0 0.0
    %454 = vmatprep.subr.mxu0 0.0
    %455 = vmatpush1.xpose.msra.mxu0 0.0
    %456 = vmatprep.subr.mxu0 0.0
    %457 = vmatpush1.xpose.msra.mxu0 0.0
    %458 = vmatprep.subr.mxu0 0.0
    %459 = vmatpush1.xpose.msra.mxu0 0.0
    %460 = vmatprep.subr.mxu0 0.0
    %461 = vmatpush1.xpose.msra.mxu0 0.0
    %462 = vmatprep.subr.mxu0 0.0
    %463 = vmatpush1.xpose.msra.mxu0 0.0
    %464 = vmatprep.subr.mxu0 0.0
    %465 = vmatpush1.xpose.msra.mxu0 0.0
    %466 = vmatprep.subr.mxu0 0.0
    %467 = vmatpush1.xpose.msra.mxu0 0.0
    %468 = vmatprep.subr.mxu0 0.0
    %469 = vmatpush1.xpose.msra.mxu0 0.0
    %470 = vmatprep.subr.mxu0 0.0
    %471 = vmatpush1.xpose.msra.mxu0 0.0
    %472 = vmatprep.subr.mxu0 0.0
    %473 = vmatpush1.xpose.msra.mxu0 0.0
    %474 = vmatprep.subr.mxu0 0.0
    %475 = vmatpush1.xpose.msra.mxu0 0.0
    %476 = vmatprep.subr.mxu0 0.0
    %477 = vmatpush1.xpose.msra.mxu0 0.0
    %478 = vmatprep.subr.mxu0 0.0
    %479 = vmatpush1.xpose.msra.mxu0 0.0
    %480 = vmatprep.subr.mxu0 0.0
    %481 = vmatpush1.xpose.msra.mxu0 0.0
    %482 = vmatprep.subr.mxu0 0.0
    %483 = vmatpush1.xpose.msra.mxu0 0.0
    %484 = vmatprep.subr.mxu0 0.0
    %485 = vmatpush1.xpose.msra.mxu0 0.0
    %486 = vmatprep.subr.mxu0 0.0
    %487 = vmatpush1.xpose.msra.mxu0 0.0
    %488 = vmatprep.subr.mxu0 0.0
    %489 = vmatpush1.xpose.msra.mxu0 0.0
    %490 = vmatprep.mubr.f32.mxu0 0.0
    %491 = vmatmul.mubr.f32.gmra.mrb[0].mxu0 %v421
    %v492 = vpop.f32.mrb[0].mxu0
    %v493 = vadd.f32 0.0, %v492
    %v494 = vpop.f32.mrb[0].mxu0
    %495 = vdwg.mxu0
    %496 = vrot.lane.b32.xlu0 %v341, 112
    %v497 = vpop.permute.xlu0 %496
    %498 = vrot.lane.b32.xlu0 %v246, 112
    %v499 = vpop.permute.xlu0 %498
    %v500 = vsel %vm343, %v497, 0
    %v502 = vsel %vm343, %v499, 0
    %504 = vmatprep.subr.mxu0 0.0
    %505 = vmatpush1.xpose.msra.mxu0 %v502
    %506 = vmatprep.subr.mxu0 0.0
    %507 = vmatpush1.xpose.msra.mxu0 0.0
    %508 = vmatprep.subr.mxu0 0.0
    %509 = vmatpush1.xpose.msra.mxu0 0.0
    %510 = vmatprep.subr.mxu0 0.0
    %511 = vmatpush1.xpose.msra.mxu0 0.0
    %512 = vmatprep.subr.mxu0 0.0
    %513 = vmatpush1.xpose.msra.mxu0 0.0
    %514 = vmatprep.subr.mxu0 0.0
    %515 = vmatpush1.xpose.msra.mxu0 0.0
    %516 = vmatprep.subr.mxu0 0.0
    %517 = vmatpush1.xpose.msra.mxu0 0.0
    %518 = vmatprep.subr.mxu0 0.0
    %519 = vmatpush1.xpose.msra.mxu0 0.0
    %520 = vmatprep.subr.mxu0 0.0
    %521 = vmatpush1.xpose.msra.mxu0 0.0
    %522 = vmatprep.subr.mxu0 0.0
    %523 = vmatpush1.xpose.msra.mxu0 0.0
    %524 = vmatprep.subr.mxu0 0.0
    %525 = vmatpush1.xpose.msra.mxu0 0.0
    %526 = vmatprep.subr.mxu0 0.0
    %527 = vmatpush1.xpose.msra.mxu0 0.0
    %528 = vmatprep.subr.mxu0 0.0
    %529 = vmatpush1.xpose.msra.mxu0 0.0
    %530 = vmatprep.subr.mxu0 0.0
    %531 = vmatpush1.xpose.msra.mxu0 0.0
    %532 = vmatprep.subr.mxu0 0.0
    %533 = vmatpush1.xpose.msra.mxu0 0.0
    %534 = vmatprep.subr.mxu0 0.0
    %535 = vmatpush1.xpose.msra.mxu0 0.0
    %536 = vmatprep.subr.mxu0 0.0
    %537 = vmatpush1.xpose.msra.mxu0 0.0
    %538 = vmatprep.subr.mxu0 0.0
    %539 = vmatpush1.xpose.msra.mxu0 0.0
    %540 = vmatprep.subr.mxu0 0.0
    %541 = vmatpush1.xpose.msra.mxu0 0.0
    %542 = vmatprep.subr.mxu0 0.0
    %543 = vmatpush1.xpose.msra.mxu0 0.0
    %544 = vmatprep.subr.mxu0 0.0
    %545 = vmatpush1.xpose.msra.mxu0 0.0
    %546 = vmatprep.subr.mxu0 0.0
    %547 = vmatpush1.xpose.msra.mxu0 0.0
    %548 = vmatprep.subr.mxu0 0.0
    %549 = vmatpush1.xpose.msra.mxu0 0.0
    %550 = vmatprep.subr.mxu0 0.0
    %551 = vmatpush1.xpose.msra.mxu0 0.0
    %552 = vmatprep.subr.mxu0 0.0
    %553 = vmatpush1.xpose.msra.mxu0 0.0
    %554 = vmatprep.subr.mxu0 0.0
    %555 = vmatpush1.xpose.msra.mxu0 0.0
    %556 = vmatprep.subr.mxu0 0.0
    %557 = vmatpush1.xpose.msra.mxu0 0.0
    %558 = vmatprep.subr.mxu0 0.0
    %559 = vmatpush1.xpose.msra.mxu0 0.0
    %560 = vmatprep.subr.mxu0 0.0
    %561 = vmatpush1.xpose.msra.mxu0 0.0
    %562 = vmatprep.subr.mxu0 0.0
    %563 = vmatpush1.xpose.msra.mxu0 0.0
    %564 = vmatprep.subr.mxu0 0.0
    %565 = vmatpush1.xpose.msra.mxu0 0.0
    %566 = vmatprep.subr.mxu0 0.0
    %567 = vmatpush1.xpose.msra.mxu0 0.0
    %568 = vmatprep.mubr.f32.mxu0 0.0
    %569 = vmatmul.mubr.f32.gmra.mrb[0].mxu0 %v500
    %v570 = vpop.f32.mrb[0].mxu0
    %v571 = vadd.f32 0.0, %v570
    %v572 = vpop.f32.mrb[0].mxu0
    %573 = vdwg.mxu0
    %574 = vrot.lane.b32.xlu0 %v342, 112
    %v575 = vpop.permute.xlu0 %574
    %576 = vrot.lane.b32.xlu0 %v251, 112
    %v577 = vpop.permute.xlu0 %576
    %v578 = vsel %vm343, %v575, 0
    %v580 = vsel %vm343, %v577, 0
    %582 = vmatprep.subr.mxu0 0.0
    %583 = vmatpush1.xpose.msra.mxu0 %v580
    %584 = vmatprep.subr.mxu0 0.0
    %585 = vmatpush1.xpose.msra.mxu0 0.0
    %586 = vmatprep.subr.mxu0 0.0
    %587 = vmatpush1.xpose.msra.mxu0 0.0
    %588 = vmatprep.subr.mxu0 0.0
    %589 = vmatpush1.xpose.msra.mxu0 0.0
    %590 = vmatprep.subr.mxu0 0.0
    %591 = vmatpush1.xpose.msra.mxu0 0.0
    %592 = vmatprep.subr.mxu0 0.0
    %593 = vmatpush1.xpose.msra.mxu0 0.0
    %594 = vmatprep.subr.mxu0 0.0
    %595 = vmatpush1.xpose.msra.mxu0 0.0
    %596 = vmatprep.subr.mxu0 0.0
    %597 = vmatpush1.xpose.msra.mxu0 0.0
    %598 = vmatprep.subr.mxu0 0.0
    %599 = vmatpush1.xpose.msra.mxu0 0.0
    %600 = vmatprep.subr.mxu0 0.0
    %601 = vmatpush1.xpose.msra.mxu0 0.0
    %602 = vmatprep.subr.mxu0 0.0
    %603 = vmatpush1.xpose.msra.mxu0 0.0
    %604 = vmatprep.subr.mxu0 0.0
    %605 = vmatpush1.xpose.msra.mxu0 0.0
    %606 = vmatprep.subr.mxu0 0.0
    %607 = vmatpush1.xpose.msra.mxu0 0.0
    %608 = vmatprep.subr.mxu0 0.0
    %609 = vmatpush1.xpose.msra.mxu0 0.0
    %610 = vmatprep.subr.mxu0 0.0
    %611 = vmatpush1.xpose.msra.mxu0 0.0
    %612 = vmatprep.subr.mxu0 0.0
    %613 = vmatpush1.xpose.msra.mxu0 0.0
    %614 = vmatprep.subr.mxu0 0.0
    %615 = vmatpush1.xpose.msra.mxu0 0.0
    %616 = vmatprep.subr.mxu0 0.0
    %617 = vmatpush1.xpose.msra.mxu0 0.0
    %618 = vmatprep.subr.mxu0 0.0
    %619 = vmatpush1.xpose.msra.mxu0 0.0
    %620 = vmatprep.subr.mxu0 0.0
    %621 = vmatpush1.xpose.msra.mxu0 0.0
    %622 = vmatprep.subr.mxu0 0.0
    %623 = vmatpush1.xpose.msra.mxu0 0.0
    %624 = vmatprep.subr.mxu0 0.0
    %625 = vmatpush1.xpose.msra.mxu0 0.0
    %626 = vmatprep.subr.mxu0 0.0
    %627 = vmatpush1.xpose.msra.mxu0 0.0
    %628 = vmatprep.subr.mxu0 0.0
    %629 = vmatpush1.xpose.msra.mxu0 0.0
    %630 = vmatprep.subr.mxu0 0.0
    %631 = vmatpush1.xpose.msra.mxu0 0.0
    %632 = vmatprep.subr.mxu0 0.0
    %633 = vmatpush1.xpose.msra.mxu0 0.0
    %634 = vmatprep.subr.mxu0 0.0
    %635 = vmatpush1.xpose.msra.mxu0 0.0
    %636 = vmatprep.subr.mxu0 0.0
    %637 = vmatpush1.xpose.msra.mxu0 0.0
    %638 = vmatprep.subr.mxu0 0.0
    %639 = vmatpush1.xpose.msra.mxu0 0.0
    %640 = vmatprep.subr.mxu0 0.0
    %641 = vmatpush1.xpose.msra.mxu0 0.0
    %642 = vmatprep.subr.mxu0 0.0
    %643 = vmatpush1.xpose.msra.mxu0 0.0
    %644 = vmatprep.subr.mxu0 0.0
    %645 = vmatpush1.xpose.msra.mxu0 0.0
    %646 = vmatprep.mubr.f32.mxu0 0.0
    %647 = vmatmul.mubr.f32.gmra.mrb[0].mxu0 %v578
    %v648 = vpop.f32.mrb[0].mxu0
    %v649 = vadd.f32 0.0, %v648
    %v650 = vpop.f32.mrb[0].mxu0
    %651 = vdwg.mxu0
    %652 = vrot.lane.b32.xlu0 %v341, 96
    %v653 = vpop.permute.xlu0 %652
    %654 = vrot.lane.b32.xlu0 %v246, 96
    %v655 = vpop.permute.xlu0 %654
    %v656 = vsel %vm343, %v653, 0
    %v658 = vsel %vm343, %v655, 0
    %660 = vmatprep.subr.mxu0 0.0
    %661 = vmatpush1.xpose.msra.mxu0 %v658
    %662 = vmatprep.subr.mxu0 0.0
    %663 = vmatpush1.xpose.msra.mxu0 0.0
    %664 = vmatprep.subr.mxu0 0.0
    %665 = vmatpush1.xpose.msra.mxu0 0.0
    %666 = vmatprep.subr.mxu0 0.0
    %667 = vmatpush1.xpose.msra.mxu0 0.0
    %668 = vmatprep.subr.mxu0 0.0
    %669 = vmatpush1.xpose.msra.mxu0 0.0
    %670 = vmatprep.subr.mxu0 0.0
    %671 = vmatpush1.xpose.msra.mxu0 0.0
    %672 = vmatprep.subr.mxu0 0.0
    %673 = vmatpush1.xpose.msra.mxu0 0.0
    %674 = vmatprep.subr.mxu0 0.0
    %675 = vmatpush1.xpose.msra.mxu0 0.0
    %676 = vmatprep.subr.mxu0 0.0
    %677 = vmatpush1.xpose.msra.mxu0 0.0
    %678 = vmatprep.subr.mxu0 0.0
    %679 = vmatpush1.xpose.msra.mxu0 0.0
    %680 = vmatprep.subr.mxu0 0.0
    %681 = vmatpush1.xpose.msra.mxu0 0.0
    %682 = vmatprep.subr.mxu0 0.0
    %683 = vmatpush1.xpose.msra.mxu0 0.0
    %684 = vmatprep.subr.mxu0 0.0
    %685 = vmatpush1.xpose.msra.mxu0 0.0
    %686 = vmatprep.subr.mxu0 0.0
    %687 = vmatpush1.xpose.msra.mxu0 0.0
    %688 = vmatprep.subr.mxu0 0.0
    %689 = vmatpush1.xpose.msra.mxu0 0.0
    %690 = vmatprep.subr.mxu0 0.0
    %691 = vmatpush1.xpose.msra.mxu0 0.0
    %692 = vmatprep.subr.mxu0 0.0
    %693 = vmatpush1.xpose.msra.mxu0 0.0
    %694 = vmatprep.subr.mxu0 0.0
    %695 = vmatpush1.xpose.msra.mxu0 0.0
    %696 = vmatprep.subr.mxu0 0.0
    %697 = vmatpush1.xpose.msra.mxu0 0.0
    %698 = vmatprep.subr.mxu0 0.0
    %699 = vmatpush1.xpose.msra.mxu0 0.0
    %700 = vmatprep.subr.mxu0 0.0
    %701 = vmatpush1.xpose.msra.mxu0 0.0
    %702 = vmatprep.subr.mxu0 0.0
    %703 = vmatpush1.xpose.msra.mxu0 0.0
    %704 = vmatprep.subr.mxu0 0.0
    %705 = vmatpush1.xpose.msra.mxu0 0.0
    %706 = vmatprep.subr.mxu0 0.0
    %707 = vmatpush1.xpose.msra.mxu0 0.0
    %708 = vmatprep.subr.mxu0 0.0
    %709 = vmatpush1.xpose.msra.mxu0 0.0
    %710 = vmatprep.subr.mxu0 0.0
    %711 = vmatpush1.xpose.msra.mxu0 0.0
    %712 = vmatprep.subr.mxu0 0.0
    %713 = vmatpush1.xpose.msra.mxu0 0.0
    %714 = vmatprep.subr.mxu0 0.0
    %715 = vmatpush1.xpose.msra.mxu0 0.0
    %716 = vmatprep.subr.mxu0 0.0
    %717 = vmatpush1.xpose.msra.mxu0 0.0
    %718 = vmatprep.subr.mxu0 0.0
    %719 = vmatpush1.xpose.msra.mxu0 0.0
    %720 = vmatprep.subr.mxu0 0.0
    %721 = vmatpush1.xpose.msra.mxu0 0.0
    %722 = vmatprep.subr.mxu0 0.0
    %723 = vmatpush1.xpose.msra.mxu0 0.0
    %724 = vmatprep.mubr.f32.mxu0 0.0
    %725 = vmatmul.mubr.f32.gmra.mrb[0].mxu0 %v656
    %v726 = vpop.f32.mrb[0].mxu0
    %v727 = vadd.f32 0.0, %v726
    %v728 = vpop.f32.mrb[0].mxu0
    %729 = vdwg.mxu0
    %730 = vrot.lane.b32.xlu0 %v342, 96
    %v731 = vpop.permute.xlu0 %730
    %732 = vrot.lane.b32.xlu0 %v251, 96
    %v733 = vpop.permute.xlu0 %732
    %v734 = vsel %vm343, %v731, 0
    %v736 = vsel %vm343, %v733, 0
    %738 = vmatprep.subr.mxu0 0.0
    %739 = vmatpush1.xpose.msra.mxu0 %v736
    %740 = vmatprep.subr.mxu0 0.0
    %741 = vmatpush1.xpose.msra.mxu0 0.0
    %742 = vmatprep.subr.mxu0 0.0
    %743 = vmatpush1.xpose.msra.mxu0 0.0
    %744 = vmatprep.subr.mxu0 0.0
    %745 = vmatpush1.xpose.msra.mxu0 0.0
    %746 = vmatprep.subr.mxu0 0.0
    %747 = vmatpush1.xpose.msra.mxu0 0.0
    %748 = vmatprep.subr.mxu0 0.0
    %749 = vmatpush1.xpose.msra.mxu0 0.0
    %750 = vmatprep.subr.mxu0 0.0
    %751 = vmatpush1.xpose.msra.mxu0 0.0
    %752 = vmatprep.subr.mxu0 0.0
    %753 = vmatpush1.xpose.msra.mxu0 0.0
    %754 = vmatprep.subr.mxu0 0.0
    %755 = vmatpush1.xpose.msra.mxu0 0.0
    %756 = vmatprep.subr.mxu0 0.0
    %757 = vmatpush1.xpose.msra.mxu0 0.0
    %758 = vmatprep.subr.mxu0 0.0
    %759 = vmatpush1.xpose.msra.mxu0 0.0
    %760 = vmatprep.subr.mxu0 0.0
    %761 = vmatpush1.xpose.msra.mxu0 0.0
    %762 = vmatprep.subr.mxu0 0.0
    %763 = vmatpush1.xpose.msra.mxu0 0.0
    %764 = vmatprep.subr.mxu0 0.0
    %765 = vmatpush1.xpose.msra.mxu0 0.0
    %766 = vmatprep.subr.mxu0 0.0
    %767 = vmatpush1.xpose.msra.mxu0 0.0
    %768 = vmatprep.subr.mxu0 0.0
    %769 = vmatpush1.xpose.msra.mxu0 0.0
    %770 = vmatprep.subr.mxu0 0.0
    %771 = vmatpush1.xpose.msra.mxu0 0.0
    %772 = vmatprep.subr.mxu0 0.0
    %773 = vmatpush1.xpose.msra.mxu0 0.0
    %774 = vmatprep.subr.mxu0 0.0
    %775 = vmatpush1.xpose.msra.mxu0 0.0
    %776 = vmatprep.subr.mxu0 0.0
    %777 = vmatpush1.xpose.msra.mxu0 0.0
    %778 = vmatprep.subr.mxu0 0.0
    %779 = vmatpush1.xpose.msra.mxu0 0.0
    %780 = vmatprep.subr.mxu0 0.0
    %781 = vmatpush1.xpose.msra.mxu0 0.0
    %782 = vmatprep.subr.mxu0 0.0
    %783 = vmatpush1.xpose.msra.mxu0 0.0
    %784 = vmatprep.subr.mxu0 0.0
    %785 = vmatpush1.xpose.msra.mxu0 0.0
    %786 = vmatprep.subr.mxu0 0.0
    %787 = vmatpush1.xpose.msra.mxu0 0.0
    %788 = vmatprep.subr.mxu0 0.0
    %789 = vmatpush1.xpose.msra.mxu0 0.0
    %790 = vmatprep.subr.mxu0 0.0
    %791 = vmatpush1.xpose.msra.mxu0 0.0
    %792 = vmatprep.subr.mxu0 0.0
    %793 = vmatpush1.xpose.msra.mxu0 0.0
    %794 = vmatprep.subr.mxu0 0.0
    %795 = vmatpush1.xpose.msra.mxu0 0.0
    %796 = vmatprep.subr.mxu0 0.0
    %797 = vmatpush1.xpose.msra.mxu0 0.0
    %798 = vmatprep.subr.mxu0 0.0
    %799 = vmatpush1.xpose.msra.mxu0 0.0
    %800 = vmatprep.subr.mxu0 0.0
    %801 = vmatpush1.xpose.msra.mxu0 0.0
    %802 = vmatprep.mubr.f32.mxu0 0.0
    %803 = vmatmul.mubr.f32.gmra.mrb[0].mxu0 %v734
    %v804 = vpop.f32.mrb[0].mxu0
    %v805 = vadd.f32 0.0, %v804
    %v806 = vpop.f32.mrb[0].mxu0
    %807 = vdwg.mxu0
    %808 = vrot.lane.b32.xlu0 %v341, 80
    %v809 = vpop.permute.xlu0 %808
    %810 = vrot.lane.b32.xlu0 %v246, 80
    %v811 = vpop.permute.xlu0 %810
    %v812 = vsel %vm343, %v809, 0
    %v814 = vsel %vm343, %v811, 0
    %816 = vmatprep.subr.mxu0 0.0
    %817 = vmatpush1.xpose.msra.mxu0 %v814
    %818 = vmatprep.subr.mxu0 0.0
    %819 = vmatpush1.xpose.msra.mxu0 0.0
    %820 = vmatprep.subr.mxu0 0.0
    %821 = vmatpush1.xpose.msra.mxu0 0.0
    %822 = vmatprep.subr.mxu0 0.0
    %823 = vmatpush1.xpose.msra.mxu0 0.0
    %824 = vmatprep.subr.mxu0 0.0
    %825 = vmatpush1.xpose.msra.mxu0 0.0
    %826 = vmatprep.subr.mxu0 0.0
    %827 = vmatpush1.xpose.msra.mxu0 0.0
    %828 = vmatprep.subr.mxu0 0.0
    %829 = vmatpush1.xpose.msra.mxu0 0.0
    %830 = vmatprep.subr.mxu0 0.0
    %831 = vmatpush1.xpose.msra.mxu0 0.0
    %832 = vmatprep.subr.mxu0 0.0
    %833 = vmatpush1.xpose.msra.mxu0 0.0
    %834 = vmatprep.subr.mxu0 0.0
    %835 = vmatpush1.xpose.msra.mxu0 0.0
    %836 = vmatprep.subr.mxu0 0.0
    %837 = vmatpush1.xpose.msra.mxu0 0.0
    %838 = vmatprep.subr.mxu0 0.0
    %839 = vmatpush1.xpose.msra.mxu0 0.0
    %840 = vmatprep.subr.mxu0 0.0
    %841 = vmatpush1.xpose.msra.mxu0 0.0
    %842 = vmatprep.subr.mxu0 0.0
    %843 = vmatpush1.xpose.msra.mxu0 0.0
    %844 = vmatprep.subr.mxu0 0.0
    %845 = vmatpush1.xpose.msra.mxu0 0.0
    %846 = vmatprep.subr.mxu0 0.0
    %847 = vmatpush1.xpose.msra.mxu0 0.0
    %848 = vmatprep.subr.mxu0 0.0
    %849 = vmatpush1.xpose.msra.mxu0 0.0
    %850 = vmatprep.subr.mxu0 0.0
    %851 = vmatpush1.xpose.msra.mxu0 0.0
    %852 = vmatprep.subr.mxu0 0.0
    %853 = vmatpush1.xpose.msra.mxu0 0.0
    %854 = vmatprep.subr.mxu0 0.0
    %855 = vmatpush1.xpose.msra.mxu0 0.0
    %856 = vmatprep.subr.mxu0 0.0
    %857 = vmatpush1.xpose.msra.mxu0 0.0
    %858 = vmatprep.subr.mxu0 0.0
    %859 = vmatpush1.xpose.msra.mxu0 0.0
    %860 = vmatprep.subr.mxu0 0.0
    %861 = vmatpush1.xpose.msra.mxu0 0.0
    %862 = vmatprep.subr.mxu0 0.0
    %863 = vmatpush1.xpose.msra.mxu0 0.0
    %864 = vmatprep.subr.mxu0 0.0
    %865 = vmatpush1.xpose.msra.mxu0 0.0
    %866 = vmatprep.subr.mxu0 0.0
    %867 = vmatpush1.xpose.msra.mxu0 0.0
    %868 = vmatprep.subr.mxu0 0.0
    %869 = vmatpush1.xpose.msra.mxu0 0.0
    %870 = vmatprep.subr.mxu0 0.0
    %871 = vmatpush1.xpose.msra.mxu0 0.0
    %872 = vmatprep.subr.mxu0 0.0
    %873 = vmatpush1.xpose.msra.mxu0 0.0
    %874 = vmatprep.subr.mxu0 0.0
    %875 = vmatpush1.xpose.msra.mxu0 0.0
    %876 = vmatprep.subr.mxu0 0.0
    %877 = vmatpush1.xpose.msra.mxu0 0.0
    %878 = vmatprep.subr.mxu0 0.0
    %879 = vmatpush1.xpose.msra.mxu0 0.0
    %880 = vmatprep.mubr.f32.mxu0 0.0
    %881 = vmatmul.mubr.f32.gmra.mrb[0].mxu0 %v812
    %v882 = vpop.f32.mrb[0].mxu0
    %v883 = vadd.f32 0.0, %v882
    %v884 = vpop.f32.mrb[0].mxu0
    %885 = vdwg.mxu0
    %886 = vrot.lane.b32.xlu0 %v342, 80
    %v887 = vpop.permute.xlu0 %886
    %888 = vrot.lane.b32.xlu0 %v251, 80
    %v889 = vpop.permute.xlu0 %888
    %v890 = vsel %vm343, %v887, 0
    %v892 = vsel %vm343, %v889, 0
    %894 = vmatprep.subr.mxu0 0.0
    %895 = vmatpush1.xpose.msra.mxu0 %v892
    %896 = vmatprep.subr.mxu0 0.0
    %897 = vmatpush1.xpose.msra.mxu0 0.0
    %898 = vmatprep.subr.mxu0 0.0
    %899 = vmatpush1.xpose.msra.mxu0 0.0
    %900 = vmatprep.subr.mxu0 0.0
    %901 = vmatpush1.xpose.msra.mxu0 0.0
    %902 = vmatprep.subr.mxu0 0.0
    %903 = vmatpush1.xpose.msra.mxu0 0.0
    %904 = vmatprep.subr.mxu0 0.0
    %905 = vmatpush1.xpose.msra.mxu0 0.0
    %906 = vmatprep.subr.mxu0 0.0
    %907 = vmatpush1.xpose.msra.mxu0 0.0
    %908 = vmatprep.subr.mxu0 0.0
    %909 = vmatpush1.xpose.msra.mxu0 0.0
    %910 = vmatprep.subr.mxu0 0.0
    %911 = vmatpush1.xpose.msra.mxu0 0.0
    %912 = vmatprep.subr.mxu0 0.0
    %913 = vmatpush1.xpose.msra.mxu0 0.0
    %914 = vmatprep.subr.mxu0 0.0
    %915 = vmatpush1.xpose.msra.mxu0 0.0
    %916 = vmatprep.subr.mxu0 0.0
    %917 = vmatpush1.xpose.msra.mxu0 0.0
    %918 = vmatprep.subr.mxu0 0.0
    %919 = vmatpush1.xpose.msra.mxu0 0.0
    %920 = vmatprep.subr.mxu0 0.0
    %921 = vmatpush1.xpose.msra.mxu0 0.0
    %922 = vmatprep.subr.mxu0 0.0
    %923 = vmatpush1.xpose.msra.mxu0 0.0
    %924 = vmatprep.subr.mxu0 0.0
    %925 = vmatpush1.xpose.msra.mxu0 0.0
    %926 = vmatprep.subr.mxu0 0.0
    %927 = vmatpush1.xpose.msra.mxu0 0.0
    %928 = vmatprep.subr.mxu0 0.0
    %929 = vmatpush1.xpose.msra.mxu0 0.0
    %930 = vmatprep.subr.mxu0 0.0
    %931 = vmatpush1.xpose.msra.mxu0 0.0
    %932 = vmatprep.subr.mxu0 0.0
    %933 = vmatpush1.xpose.msra.mxu0 0.0
    %934 = vmatprep.subr.mxu0 0.0
    %935 = vmatpush1.xpose.msra.mxu0 0.0
    %936 = vmatprep.subr.mxu0 0.0
    %937 = vmatpush1.xpose.msra.mxu0 0.0
    %938 = vmatprep.subr.mxu0 0.0
    %939 = vmatpush1.xpose.msra.mxu0 0.0
    %940 = vmatprep.subr.mxu0 0.0
    %941 = vmatpush1.xpose.msra.mxu0 0.0
    %942 = vmatprep.subr.mxu0 0.0
    %943 = vmatpush1.xpose.msra.mxu0 0.0
    %944 = vmatprep.subr.mxu0 0.0
    %945 = vmatpush1.xpose.msra.mxu0 0.0
    %946 = vmatprep.subr.mxu0 0.0
    %947 = vmatpush1.xpose.msra.mxu0 0.0
    %948 = vmatprep.subr.mxu0 0.0
    %949 = vmatpush1.xpose.msra.mxu0 0.0
    %950 = vmatprep.subr.mxu0 0.0
    %951 = vmatpush1.xpose.msra.mxu0 0.0
    %952 = vmatprep.subr.mxu0 0.0
    %953 = vmatpush1.xpose.msra.mxu0 0.0
    %954 = vmatprep.subr.mxu0 0.0
    %955 = vmatpush1.xpose.msra.mxu0 0.0
    %956 = vmatprep.subr.mxu0 0.0
    %957 = vmatpush1.xpose.msra.mxu0 0.0
    %958 = vmatprep.mubr.f32.mxu0 0.0
    %959 = vmatmul.mubr.f32.gmra.mrb[0].mxu0 %v890
    %v960 = vpop.f32.mrb[0].mxu0
    %v961 = vadd.f32 0.0, %v960
    %v962 = vpop.f32.mrb[0].mxu0
    %963 = vdwg.mxu0
    %v964 = vmul.f32 %v417, %v417
    %v965 = vmul.f32 %v493, %v493
    %v966 = vmul.f32 %v571, %v571
    %v967 = vmul.f32 %v649, %v649
    %v968 = vmul.f32 %v727, %v727
    %v969 = vmul.f32 %v805, %v805
    %v970 = vmul.f32 %v883, %v883
    %v971 = vmul.f32 %v961, %v961
    %vm972 = vcmask 64512
    %v973 = vsel %vm972, %v964, 0.0
    %974 = vadd.xlane.f32.xlu0 %v973
    %v975 = vpop.xlane.xlu0 %974
    %v976 = vsel %vm972, %v965, 0.0
    %977 = vadd.xlane.f32.xlu0 %v976
    %v978 = vpop.xlane.xlu0 %977
    %v979 = vsel %vm972, %v966, 0.0
    %980 = vadd.xlane.f32.xlu0 %v979
    %v981 = vpop.xlane.xlu0 %980
    %v982 = vsel %vm972, %v967, 0.0
    %983 = vadd.xlane.f32.xlu0 %v982
    %v984 = vpop.xlane.xlu0 %983
    %v985 = vsel %vm972, %v968, 0.0
    %986 = vadd.xlane.f32.xlu0 %v985
    %v987 = vpop.xlane.xlu0 %986
    %v988 = vsel %vm972, %v969, 0.0
    %989 = vadd.xlane.f32.xlu0 %v988
    %v990 = vpop.xlane.xlu0 %989
    %v991 = vsel %vm972, %v970, 0.0
    %992 = vadd.xlane.f32.xlu0 %v991
    %v993 = vpop.xlane.xlu0 %992
    %v994 = vsel %vm972, %v971, 0.0
    %995 = vadd.xlane.f32.xlu0 %v994
    %v996 = vpop.xlane.xlu0 %995
    %v997 = vmax.f32 %v975, 1e-24
    %v998 = vmax.f32 %v978, 1e-24
    %v999 = vmax.f32 %v981, 1e-24
    %v1000 = vmax.f32 %v984, 1e-24
    %v1001 = vmax.f32 %v987, 1e-24
    %v1002 = vmax.f32 %v990, 1e-24
    %v1003 = vmax.f32 %v993, 1e-24
    %v1004 = vmax.f32 %v996, 1e-24
    %v1005 = vrsqrt.pop %v997
    %v1006 = vrsqrt.pop %v998
    %v1007 = vrsqrt.pop %v999
    %v1008 = vrsqrt.pop %v1000
    %v1009 = vrsqrt.pop %v1001
    %v1010 = vrsqrt.pop %v1002
    %v1011 = vrsqrt.pop %v1003
    %v1012 = vrsqrt.pop %v1004
    %v1013 = vmul.f32 %v417, %v1005
    %v1014 = vmul.f32 %v493, %v1006
    %v1015 = vmul.f32 %v571, %v1007
    %v1016 = vmul.f32 %v649, %v1008
    %v1017 = vmul.f32 %v727, %v1009
    %v1018 = vmul.f32 %v805, %v1010
    %v1019 = vmul.f32 %v883, %v1011
    %v1020 = vmul.f32 %v961, %v1012
    %v1021 = vmul.f32 %v1013, 1.442695
    %v1022 = vpow.pop %v1021
    %v1023 = vmul.f32 %v1014, 1.442695
    %v1024 = vpow.pop %v1023
    %v1025 = vmul.f32 %v1015, 1.442695
    %v1026 = vpow.pop %v1025
    %v1027 = vmul.f32 %v1016, 1.442695
    %v1028 = vpow.pop %v1027
    %v1029 = vmul.f32 %v1017, 1.442695
    %v1030 = vpow.pop %v1029
    %v1031 = vmul.f32 %v1018, 1.442695
    %v1032 = vpow.pop %v1031
    %v1033 = vmul.f32 %v1019, 1.442695
    %v1034 = vpow.pop %v1033
    %v1035 = vmul.f32 %v1020, 1.442695
    %v1036 = vpow.pop %v1035
    %v1037 = vsel %vm972, %v1022, 0.0
    %1038 = vadd.xlane.f32.xlu0 %v1037
    %v1039 = vpop.xlane.xlu0 %1038
    %v1040 = vsel %vm972, %v1024, 0.0
    %1041 = vadd.xlane.f32.xlu0 %v1040
    %v1042 = vpop.xlane.xlu0 %1041
    %v1043 = vsel %vm972, %v1026, 0.0
    %1044 = vadd.xlane.f32.xlu0 %v1043
    %v1045 = vpop.xlane.xlu0 %1044
    %v1046 = vsel %vm972, %v1028, 0.0
    %1047 = vadd.xlane.f32.xlu0 %v1046
    %v1048 = vpop.xlane.xlu0 %1047
    %v1049 = vsel %vm972, %v1030, 0.0
    %1050 = vadd.xlane.f32.xlu0 %v1049
    %v1051 = vpop.xlane.xlu0 %1050
    %v1052 = vsel %vm972, %v1032, 0.0
    %1053 = vadd.xlane.f32.xlu0 %v1052
    %v1054 = vpop.xlane.xlu0 %1053
    %v1055 = vsel %vm972, %v1034, 0.0
    %1056 = vadd.xlane.f32.xlu0 %v1055
    %v1057 = vpop.xlane.xlu0 %1056
    %v1058 = vsel %vm972, %v1036, 0.0
    %1059 = vadd.xlane.f32.xlu0 %v1058
    %v1060 = vpop.xlane.xlu0 %1059
    %v1061 = vrcp.pop %v1039
    %v1062 = vrcp.pop %v1042
    %v1063 = vrcp.pop %v1045
    %v1064 = vrcp.pop %v1048
    %v1065 = vrcp.pop %v1051
    %v1066 = vrcp.pop %v1054
    %v1067 = vrcp.pop %v1057
    %v1068 = vrcp.pop %v1060
    %v1069 = vmul.f32 %v1039, %v1061
    %v1070 = vmul.f32 %v1042, %v1062
    %v1071 = vmul.f32 %v1045, %v1063
    %v1072 = vmul.f32 %v1048, %v1064
    %v1073 = vmul.f32 %v1051, %v1065
    %v1074 = vmul.f32 %v1054, %v1066
    %v1075 = vmul.f32 %v1057, %v1067
    %v1076 = vmul.f32 %v1060, %v1068
    %v1077 = vsub.f32 2.0, %v1069
    %v1078 = vsub.f32 2.0, %v1070
    %v1079 = vsub.f32 2.0, %v1071
    %v1080 = vsub.f32 2.0, %v1072
    %v1081 = vsub.f32 2.0, %v1073
    %v1082 = vsub.f32 2.0, %v1074
    %v1083 = vsub.f32 2.0, %v1075
    %v1084 = vsub.f32 2.0, %v1076
    %v1085 = vmul.f32 %v1061, %v1077
    %v1086 = vmul.f32 %v1062, %v1078
    %v1087 = vmul.f32 %v1063, %v1079
    %v1088 = vmul.f32 %v1064, %v1080
    %v1089 = vmul.f32 %v1065, %v1081
    %v1090 = vmul.f32 %v1066, %v1082
    %v1091 = vmul.f32 %v1067, %v1083
    %v1092 = vmul.f32 %v1068, %v1084
    %v1093 = vmul.f32 %v1022, %v1085
    %v1094 = vmul.f32 %v1024, %v1086
    %v1095 = vmul.f32 %v1026, %v1087
    %v1096 = vmul.f32 %v1028, %v1088
    %v1097 = vmul.f32 %v1030, %v1089
    %v1098 = vmul.f32 %v1032, %v1090
    %v1099 = vmul.f32 %v1034, %v1091
    %v1100 = vmul.f32 %v1036, %v1092
    %1101 = vst.msk [vmem:[#allocation4] sm:$0xff] %vm972, %v1093
    %1102 = vst.msk [vmem:[#allocation4 + $0x8] sm:$0xff] %vm972, %v1094
    %1103 = vst.msk [vmem:[#allocation4 + $0x10] sm:$0xff] %vm972, %v1095
    %1104 = vst.msk [vmem:[#allocation4 + $0x18] sm:$0xff] %vm972, %v1096
    %1105 = vst.msk [vmem:[#allocation4 + $0x20] sm:$0xff] %vm972, %v1097
    %1106 = vst.msk [vmem:[#allocation4 + $0x28] sm:$0xff] %vm972, %v1098
    %1107 = vst.msk [vmem:[#allocation4 + $0x30] sm:$0xff] %vm972, %v1099
    %1108 = vst.msk [vmem:[#allocation4 + $0x38] sm:$0xff] %vm972, %v1100
    %v1110 = vsel %vm972, %v1093, 0
    %1112 = vmatprep.subr.mxu0 0.0
    %1113 = vmatpush1.msra.mxu0 %v333
    %1114 = vmatprep.subr.mxu0 0.0
    %1115 = vmatpush1.msra.mxu0 0.0
    %1116 = vmatprep.subr.mxu0 0.0
    %1117 = vmatpush1.msra.mxu0 0.0
    %1118 = vmatprep.subr.mxu0 0.0
    %1119 = vmatpush1.msra.mxu0 0.0
    %1120 = vmatprep.subr.mxu0 0.0
    %1121 = vmatpush1.msra.mxu0 0.0
    %1122 = vmatprep.subr.mxu0 0.0
    %1123 = vmatpush1.msra.mxu0 0.0
    %1124 = vmatprep.subr.mxu0 0.0
    %1125 = vmatpush1.msra.mxu0 0.0
    %1126 = vmatprep.subr.mxu0 0.0
    %1127 = vmatpush1.msra.mxu0 0.0
    %1128 = vmatprep.subr.mxu0 0.0
    %1129 = vmatpush1.msra.mxu0 0.0
    %1130 = vmatprep.subr.mxu0 0.0
    %1131 = vmatpush1.msra.mxu0 0.0
    %1132 = vmatprep.subr.mxu0 0.0
    %1133 = vmatpush1.msra.mxu0 0.0
    %1134 = vmatprep.subr.mxu0 0.0
    %1135 = vmatpush1.msra.mxu0 0.0
    %1136 = vmatprep.subr.mxu0 0.0
    %1137 = vmatpush1.msra.mxu0 0.0
    %1138 = vmatprep.subr.mxu0 0.0
    %1139 = vmatpush1.msra.mxu0 0.0
    %1140 = vmatprep.subr.mxu0 0.0
    %1141 = vmatpush1.msra.mxu0 0.0
    %1142 = vmatprep.subr.mxu0 0.0
    %1143 = vmatpush1.msra.mxu0 0.0
    %1144 = vmatprep.subr.mxu0 0.0
    %1145 = vmatpush1.msra.mxu0 0.0
    %1146 = vmatprep.subr.mxu0 0.0
    %1147 = vmatpush1.msra.mxu0 0.0
    %1148 = vmatprep.subr.mxu0 0.0
    %1149 = vmatpush1.msra.mxu0 0.0
    %1150 = vmatprep.subr.mxu0 0.0
    %1151 = vmatpush1.msra.mxu0 0.0
    %1152 = vmatprep.subr.mxu0 0.0
    %1153 = vmatpush1.msra.mxu0 0.0
    %1154 = vmatprep.subr.mxu0 0.0
    %1155 = vmatpush1.msra.mxu0 0.0
    %1156 = vmatprep.subr.mxu0 0.0
    %1157 = vmatpush1.msra.mxu0 0.0
    %1158 = vmatprep.subr.mxu0 0.0
    %1159 = vmatpush1.msra.mxu0 0.0
    %1160 = vmatprep.subr.mxu0 0.0
    %1161 = vmatpush1.msra.mxu0 0.0
    %1162 = vmatprep.subr.mxu0 0.0
    %1163 = vmatpush1.msra.mxu0 0.0
    %1164 = vmatprep.subr.mxu0 0.0
    %1165 = vmatpush1.msra.mxu0 0.0
    %1166 = vmatprep.subr.mxu0 0.0
    %1167 = vmatpush1.msra.mxu0 0.0
    %1168 = vmatprep.subr.mxu0 0.0
    %1169 = vmatpush1.msra.mxu0 0.0
    %1170 = vmatprep.subr.mxu0 0.0
    %1171 = vmatpush1.msra.mxu0 0.0
    %1172 = vmatprep.subr.mxu0 0.0
    %1173 = vmatpush1.msra.mxu0 0.0
    %1174 = vmatprep.subr.mxu0 0.0
    %1175 = vmatpush1.msra.mxu0 0.0
    %1176 = vmatprep.mubr.f32.mxu0 0.0
    %1177 = vmatmul.mubr.f32.gmra.mrb[0].mxu0 %v1110
    %v1178 = vpop.f32.mrb[0].mxu0
    %v1179 = vadd.f32 0.0, %v1178
    %v1180 = vpop.f32.mrb[0].mxu0
    %1181 = vdwg.mxu0
    %v1183 = vsel %vm972, %v1094, 0
    %1185 = vmatprep.subr.mxu0 0.0
    %1186 = vmatpush1.msra.mxu0 %v338
    %1187 = vmatprep.subr.mxu0 0.0
    %1188 = vmatpush1.msra.mxu0 0.0
    %1189 = vmatprep.subr.mxu0 0.0
    %1190 = vmatpush1.msra.mxu0 0.0
    %1191 = vmatprep.subr.mxu0 0.0
    %1192 = vmatpush1.msra.mxu0 0.0
    %1193 = vmatprep.subr.mxu0 0.0
    %1194 = vmatpush1.msra.mxu0 0.0
    %1195 = vmatprep.subr.mxu0 0.0
    %1196 = vmatpush1.msra.mxu0 0.0
    %1197 = vmatprep.subr.mxu0 0.0
    %1198 = vmatpush1.msra.mxu0 0.0
    %1199 = vmatprep.subr.mxu0 0.0
    %1200 = vmatpush1.msra.mxu0 0.0
    %1201 = vmatprep.subr.mxu0 0.0
    %1202 = vmatpush1.msra.mxu0 0.0
    %1203 = vmatprep.subr.mxu0 0.0
    %1204 = vmatpush1.msra.mxu0 0.0
    %1205 = vmatprep.subr.mxu0 0.0
    %1206 = vmatpush1.msra.mxu0 0.0
    %1207 = vmatprep.subr.mxu0 0.0
    %1208 = vmatpush1.msra.mxu0 0.0
    %1209 = vmatprep.subr.mxu0 0.0
    %1210 = vmatpush1.msra.mxu0 0.0
    %1211 = vmatprep.subr.mxu0 0.0
    %1212 = vmatpush1.msra.mxu0 0.0
    %1213 = vmatprep.subr.mxu0 0.0
    %1214 = vmatpush1.msra.mxu0 0.0
    %1215 = vmatprep.subr.mxu0 0.0
    %1216 = vmatpush1.msra.mxu0 0.0
    %1217 = vmatprep.subr.mxu0 0.0
    %1218 = vmatpush1.msra.mxu0 0.0
    %1219 = vmatprep.subr.mxu0 0.0
    %1220 = vmatpush1.msra.mxu0 0.0
    %1221 = vmatprep.subr.mxu0 0.0
    %1222 = vmatpush1.msra.mxu0 0.0
    %1223 = vmatprep.subr.mxu0 0.0
    %1224 = vmatpush1.msra.mxu0 0.0
    %1225 = vmatprep.subr.mxu0 0.0
    %1226 = vmatpush1.msra.mxu0 0.0
    %1227 = vmatprep.subr.mxu0 0.0
    %1228 = vmatpush1.msra.mxu0 0.0
    %1229 = vmatprep.subr.mxu0 0.0
    %1230 = vmatpush1.msra.mxu0 0.0
    %1231 = vmatprep.subr.mxu0 0.0
    %1232 = vmatpush1.msra.mxu0 0.0
    %1233 = vmatprep.subr.mxu0 0.0
    %1234 = vmatpush1.msra.mxu0 0.0
    %1235 = vmatprep.subr.mxu0 0.0
    %1236 = vmatpush1.msra.mxu0 0.0
    %1237 = vmatprep.subr.mxu0 0.0
    %1238 = vmatpush1.msra.mxu0 0.0
    %1239 = vmatprep.subr.mxu0 0.0
    %1240 = vmatpush1.msra.mxu0 0.0
    %1241 = vmatprep.subr.mxu0 0.0
    %1242 = vmatpush1.msra.mxu0 0.0
    %1243 = vmatprep.subr.mxu0 0.0
    %1244 = vmatpush1.msra.mxu0 0.0
    %1245 = vmatprep.subr.mxu0 0.0
    %1246 = vmatpush1.msra.mxu0 0.0
    %1247 = vmatprep.subr.mxu0 0.0
    %1248 = vmatpush1.msra.mxu0 0.0
    %1249 = vmatprep.mubr.f32.mxu0 0.0
    %1250 = vmatmul.mubr.f32.gmra.mrb[0].mxu0 %v1183
    %v1251 = vpop.f32.mrb[0].mxu0
    %v1252 = vadd.f32 0.0, %v1251
    %v1253 = vpop.f32.mrb[0].mxu0
    %1254 = vdwg.mxu0
    %1256 = vrot.lane.b32.xlu0 %v333, 112
    %v1257 = vpop.permute.xlu0 %1256
    %v1260 = vsel %vm972, %v1095, 0
    %1262 = vmatprep.subr.mxu0 0.0
    %1263 = vmatpush1.msra.mxu0 %v1257
    %1264 = vmatprep.subr.mxu0 0.0
    %1265 = vmatpush1.msra.mxu0 0.0
    %1266 = vmatprep.subr.mxu0 0.0
    %1267 = vmatpush1.msra.mxu0 0.0
    %1268 = vmatprep.subr.mxu0 0.0
    %1269 = vmatpush1.msra.mxu0 0.0
    %1270 = vmatprep.subr.mxu0 0.0
    %1271 = vmatpush1.msra.mxu0 0.0
    %1272 = vmatprep.subr.mxu0 0.0
    %1273 = vmatpush1.msra.mxu0 0.0
    %1274 = vmatprep.subr.mxu0 0.0
    %1275 = vmatpush1.msra.mxu0 0.0
    %1276 = vmatprep.subr.mxu0 0.0
    %1277 = vmatpush1.msra.mxu0 0.0
    %1278 = vmatprep.subr.mxu0 0.0
    %1279 = vmatpush1.msra.mxu0 0.0
    %1280 = vmatprep.subr.mxu0 0.0
    %1281 = vmatpush1.msra.mxu0 0.0
    %1282 = vmatprep.subr.mxu0 0.0
    %1283 = vmatpush1.msra.mxu0 0.0
    %1284 = vmatprep.subr.mxu0 0.0
    %1285 = vmatpush1.msra.mxu0 0.0
    %1286 = vmatprep.subr.mxu0 0.0
    %1287 = vmatpush1.msra.mxu0 0.0
    %1288 = vmatprep.subr.mxu0 0.0
    %1289 = vmatpush1.msra.mxu0 0.0
    %1290 = vmatprep.subr.mxu0 0.0
    %1291 = vmatpush1.msra.mxu0 0.0
    %1292 = vmatprep.subr.mxu0 0.0
    %1293 = vmatpush1.msra.mxu0 0.0
    %1294 = vmatprep.subr.mxu0 0.0
    %1295 = vmatpush1.msra.mxu0 0.0
    %1296 = vmatprep.subr.mxu0 0.0
    %1297 = vmatpush1.msra.mxu0 0.0
    %1298 = vmatprep.subr.mxu0 0.0
    %1299 = vmatpush1.msra.mxu0 0.0
    %1300 = vmatprep.subr.mxu0 0.0
    %1301 = vmatpush1.msra.mxu0 0.0
    %1302 = vmatprep.subr.mxu0 0.0
    %1303 = vmatpush1.msra.mxu0 0.0
    %1304 = vmatprep.subr.mxu0 0.0
    %1305 = vmatpush1.msra.mxu0 0.0
    %1306 = vmatprep.subr.mxu0 0.0
    %1307 = vmatpush1.msra.mxu0 0.0
    %1308 = vmatprep.subr.mxu0 0.0
    %1309 = vmatpush1.msra.mxu0 0.0
    %1310 = vmatprep.subr.mxu0 0.0
    %1311 = vmatpush1.msra.mxu0 0.0
    %1312 = vmatprep.subr.mxu0 0.0
    %1313 = vmatpush1.msra.mxu0 0.0
    %1314 = vmatprep.subr.mxu0 0.0
    %1315 = vmatpush1.msra.mxu0 0.0
    %1316 = vmatprep.subr.mxu0 0.0
    %1317 = vmatpush1.msra.mxu0 0.0
    %1318 = vmatprep.subr.mxu0 0.0
    %1319 = vmatpush1.msra.mxu0 0.0
    %1320 = vmatprep.subr.mxu0 0.0
    %1321 = vmatpush1.msra.mxu0 0.0
    %1322 = vmatprep.subr.mxu0 0.0
    %1323 = vmatpush1.msra.mxu0 0.0
    %1324 = vmatprep.subr.mxu0 0.0
    %1325 = vmatpush1.msra.mxu0 0.0
    %1326 = vmatprep.mubr.f32.mxu0 0.0
    %1327 = vmatmul.mubr.f32.gmra.mrb[0].mxu0 %v1260
    %v1328 = vpop.f32.mrb[0].mxu0
    %v1329 = vadd.f32 0.0, %v1328
    %v1330 = vpop.f32.mrb[0].mxu0
    %1331 = vdwg.mxu0
    %1333 = vrot.lane.b32.xlu0 %v338, 112
    %v1334 = vpop.permute.xlu0 %1333
    %v1337 = vsel %vm972, %v1096, 0
    %1339 = vmatprep.subr.mxu0 0.0
    %1340 = vmatpush1.msra.mxu0 %v1334
    %1341 = vmatprep.subr.mxu0 0.0
    %1342 = vmatpush1.msra.mxu0 0.0
    %1343 = vmatprep.subr.mxu0 0.0
    %1344 = vmatpush1.msra.mxu0 0.0
    %1345 = vmatprep.subr.mxu0 0.0
    %1346 = vmatpush1.msra.mxu0 0.0
    %1347 = vmatprep.subr.mxu0 0.0
    %1348 = vmatpush1.msra.mxu0 0.0
    %1349 = vmatprep.subr.mxu0 0.0
    %1350 = vmatpush1.msra.mxu0 0.0
    %1351 = vmatprep.subr.mxu0 0.0
    %1352 = vmatpush1.msra.mxu0 0.0
    %1353 = vmatprep.subr.mxu0 0.0
    %1354 = vmatpush1.msra.mxu0 0.0
    %1355 = vmatprep.subr.mxu0 0.0
    %1356 = vmatpush1.msra.mxu0 0.0
    %1357 = vmatprep.subr.mxu0 0.0
    %1358 = vmatpush1.msra.mxu0 0.0
    %1359 = vmatprep.subr.mxu0 0.0
    %1360 = vmatpush1.msra.mxu0 0.0
    %1361 = vmatprep.subr.mxu0 0.0
    %1362 = vmatpush1.msra.mxu0 0.0
    %1363 = vmatprep.subr.mxu0 0.0
    %1364 = vmatpush1.msra.mxu0 0.0
    %1365 = vmatprep.subr.mxu0 0.0
    %1366 = vmatpush1.msra.mxu0 0.0
    %1367 = vmatprep.subr.mxu0 0.0
    %1368 = vmatpush1.msra.mxu0 0.0
    %1369 = vmatprep.subr.mxu0 0.0
    %1370 = vmatpush1.msra.mxu0 0.0
    %1371 = vmatprep.subr.mxu0 0.0
    %1372 = vmatpush1.msra.mxu0 0.0
    %1373 = vmatprep.subr.mxu0 0.0
    %1374 = vmatpush1.msra.mxu0 0.0
    %1375 = vmatprep.subr.mxu0 0.0
    %1376 = vmatpush1.msra.mxu0 0.0
    %1377 = vmatprep.subr.mxu0 0.0
    %1378 = vmatpush1.msra.mxu0 0.0
    %1379 = vmatprep.subr.mxu0 0.0
    %1380 = vmatpush1.msra.mxu0 0.0
    %1381 = vmatprep.subr.mxu0 0.0
    %1382 = vmatpush1.msra.mxu0 0.0
    %1383 = vmatprep.subr.mxu0 0.0
    %1384 = vmatpush1.msra.mxu0 0.0
    %1385 = vmatprep.subr.mxu0 0.0
    %1386 = vmatpush1.msra.mxu0 0.0
    %1387 = vmatprep.subr.mxu0 0.0
    %1388 = vmatpush1.msra.mxu0 0.0
    %1389 = vmatprep.subr.mxu0 0.0
    %1390 = vmatpush1.msra.mxu0 0.0
    %1391 = vmatprep.subr.mxu0 0.0
    %1392 = vmatpush1.msra.mxu0 0.0
    %1393 = vmatprep.subr.mxu0 0.0
    %1394 = vmatpush1.msra.mxu0 0.0
    %1395 = vmatprep.subr.mxu0 0.0
    %1396 = vmatpush1.msra.mxu0 0.0
    %1397 = vmatprep.subr.mxu0 0.0
    %1398 = vmatpush1.msra.mxu0 0.0
    %1399 = vmatprep.subr.mxu0 0.0
    %1400 = vmatpush1.msra.mxu0 0.0
    %1401 = vmatprep.subr.mxu0 0.0
    %1402 = vmatpush1.msra.mxu0 0.0
    %1403 = vmatprep.mubr.f32.mxu0 0.0
    %1404 = vmatmul.mubr.f32.gmra.mrb[0].mxu0 %v1337
    %v1405 = vpop.f32.mrb[0].mxu0
    %v1406 = vadd.f32 0.0, %v1405
    %v1407 = vpop.f32.mrb[0].mxu0
    %1408 = vdwg.mxu0
    %1409 = vrot.lane.b32.xlu0 %v333, 96
    %v1410 = vpop.permute.xlu0 %1409
    %v1413 = vsel %vm972, %v1097, 0
    %1415 = vmatprep.subr.mxu0 0.0
    %1416 = vmatpush1.msra.mxu0 %v1410
    %1417 = vmatprep.subr.mxu0 0.0
    %1418 = vmatpush1.msra.mxu0 0.0
    %1419 = vmatprep.subr.mxu0 0.0
    %1420 = vmatpush1.msra.mxu0 0.0
    %1421 = vmatprep.subr.mxu0 0.0
    %1422 = vmatpush1.msra.mxu0 0.0
    %1423 = vmatprep.subr.mxu0 0.0
    %1424 = vmatpush1.msra.mxu0 0.0
    %1425 = vmatprep.subr.mxu0 0.0
    %1426 = vmatpush1.msra.mxu0 0.0
    %1427 = vmatprep.subr.mxu0 0.0
    %1428 = vmatpush1.msra.mxu0 0.0
    %1429 = vmatprep.subr.mxu0 0.0
    %1430 = vmatpush1.msra.mxu0 0.0
    %1431 = vmatprep.subr.mxu0 0.0
    %1432 = vmatpush1.msra.mxu0 0.0
    %1433 = vmatprep.subr.mxu0 0.0
    %1434 = vmatpush1.msra.mxu0 0.0
    %1435 = vmatprep.subr.mxu0 0.0
    %1436 = vmatpush1.msra.mxu0 0.0
    %1437 = vmatprep.subr.mxu0 0.0
    %1438 = vmatpush1.msra.mxu0 0.0
    %1439 = vmatprep.subr.mxu0 0.0
    %1440 = vmatpush1.msra.mxu0 0.0
    %1441 = vmatprep.subr.mxu0 0.0
    %1442 = vmatpush1.msra.mxu0 0.0
    %1443 = vmatprep.subr.mxu0 0.0
    %1444 = vmatpush1.msra.mxu0 0.0
    %1445 = vmatprep.subr.mxu0 0.0
    %1446 = vmatpush1.msra.mxu0 0.0
    %1447 = vmatprep.subr.mxu0 0.0
    %1448 = vmatpush1.msra.mxu0 0.0
    %1449 = vmatprep.subr.mxu0 0.0
    %1450 = vmatpush1.msra.mxu0 0.0
    %1451 = vmatprep.subr.mxu0 0.0
    %1452 = vmatpush1.msra.mxu0 0.0
    %1453 = vmatprep.subr.mxu0 0.0
    %1454 = vmatpush1.msra.mxu0 0.0
    %1455 = vmatprep.subr.mxu0 0.0
    %1456 = vmatpush1.msra.mxu0 0.0
    %1457 = vmatprep.subr.mxu0 0.0
    %1458 = vmatpush1.msra.mxu0 0.0
    %1459 = vmatprep.subr.mxu0 0.0
    %1460 = vmatpush1.msra.mxu0 0.0
    %1461 = vmatprep.subr.mxu0 0.0
    %1462 = vmatpush1.msra.mxu0 0.0
    %1463 = vmatprep.subr.mxu0 0.0
    %1464 = vmatpush1.msra.mxu0 0.0
    %1465 = vmatprep.subr.mxu0 0.0
    %1466 = vmatpush1.msra.mxu0 0.0
    %1467 = vmatprep.subr.mxu0 0.0
    %1468 = vmatpush1.msra.mxu0 0.0
    %1469 = vmatprep.subr.mxu0 0.0
    %1470 = vmatpush1.msra.mxu0 0.0
    %1471 = vmatprep.subr.mxu0 0.0
    %1472 = vmatpush1.msra.mxu0 0.0
    %1473 = vmatprep.subr.mxu0 0.0
    %1474 = vmatpush1.msra.mxu0 0.0
    %1475 = vmatprep.subr.mxu0 0.0
    %1476 = vmatpush1.msra.mxu0 0.0
    %1477 = vmatprep.subr.mxu0 0.0
    %1478 = vmatpush1.msra.mxu0 0.0
    %1479 = vmatprep.mubr.f32.mxu0 0.0
    %1480 = vmatmul.mubr.f32.gmra.mrb[0].mxu0 %v1413
    %v1481 = vpop.f32.mrb[0].mxu0
    %v1482 = vadd.f32 0.0, %v1481
    %v1483 = vpop.f32.mrb[0].mxu0
    %1484 = vdwg.mxu0
    %1485 = vrot.lane.b32.xlu0 %v338, 96
    %v1486 = vpop.permute.xlu0 %1485
    %v1489 = vsel %vm972, %v1098, 0
    %1491 = vmatprep.subr.mxu0 0.0
    %1492 = vmatpush1.msra.mxu0 %v1486
    %1493 = vmatprep.subr.mxu0 0.0
    %1494 = vmatpush1.msra.mxu0 0.0
    %1495 = vmatprep.subr.mxu0 0.0
    %1496 = vmatpush1.msra.mxu0 0.0
    %1497 = vmatprep.subr.mxu0 0.0
    %1498 = vmatpush1.msra.mxu0 0.0
    %1499 = vmatprep.subr.mxu0 0.0
    %1500 = vmatpush1.msra.mxu0 0.0
    %1501 = vmatprep.subr.mxu0 0.0
    %1502 = vmatpush1.msra.mxu0 0.0
    %1503 = vmatprep.subr.mxu0 0.0
    %1504 = vmatpush1.msra.mxu0 0.0
    %1505 = vmatprep.subr.mxu0 0.0
    %1506 = vmatpush1.msra.mxu0 0.0
    %1507 = vmatprep.subr.mxu0 0.0
    %1508 = vmatpush1.msra.mxu0 0.0
    %1509 = vmatprep.subr.mxu0 0.0
    %1510 = vmatpush1.msra.mxu0 0.0
    %1511 = vmatprep.subr.mxu0 0.0
    %1512 = vmatpush1.msra.mxu0 0.0
    %1513 = vmatprep.subr.mxu0 0.0
    %1514 = vmatpush1.msra.mxu0 0.0
    %1515 = vmatprep.subr.mxu0 0.0
    %1516 = vmatpush1.msra.mxu0 0.0
    %1517 = vmatprep.subr.mxu0 0.0
    %1518 = vmatpush1.msra.mxu0 0.0
    %1519 = vmatprep.subr.mxu0 0.0
    %1520 = vmatpush1.msra.mxu0 0.0
    %1521 = vmatprep.subr.mxu0 0.0
    %1522 = vmatpush1.msra.mxu0 0.0
    %1523 = vmatprep.subr.mxu0 0.0
    %1524 = vmatpush1.msra.mxu0 0.0
    %1525 = vmatprep.subr.mxu0 0.0
    %1526 = vmatpush1.msra.mxu0 0.0
    %1527 = vmatprep.subr.mxu0 0.0
    %1528 = vmatpush1.msra.mxu0 0.0
    %1529 = vmatprep.subr.mxu0 0.0
    %1530 = vmatpush1.msra.mxu0 0.0
    %1531 = vmatprep.subr.mxu0 0.0
    %1532 = vmatpush1.msra.mxu0 0.0
    %1533 = vmatprep.subr.mxu0 0.0
    %1534 = vmatpush1.msra.mxu0 0.0
    %1535 = vmatprep.subr.mxu0 0.0
    %1536 = vmatpush1.msra.mxu0 0.0
    %1537 = vmatprep.subr.mxu0 0.0
    %1538 = vmatpush1.msra.mxu0 0.0
    %1539 = vmatprep.subr.mxu0 0.0
    %1540 = vmatpush1.msra.mxu0 0.0
    %1541 = vmatprep.subr.mxu0 0.0
    %1542 = vmatpush1.msra.mxu0 0.0
    %1543 = vmatprep.subr.mxu0 0.0
    %1544 = vmatpush1.msra.mxu0 0.0
    %1545 = vmatprep.subr.mxu0 0.0
    %1546 = vmatpush1.msra.mxu0 0.0
    %1547 = vmatprep.subr.mxu0 0.0
    %1548 = vmatpush1.msra.mxu0 0.0
    %1549 = vmatprep.subr.mxu0 0.0
    %1550 = vmatpush1.msra.mxu0 0.0
    %1551 = vmatprep.subr.mxu0 0.0
    %1552 = vmatpush1.msra.mxu0 0.0
    %1553 = vmatprep.subr.mxu0 0.0
    %1554 = vmatpush1.msra.mxu0 0.0
    %1555 = vmatprep.mubr.f32.mxu0 0.0
    %1556 = vmatmul.mubr.f32.gmra.mrb[0].mxu0 %v1489
    %v1557 = vpop.f32.mrb[0].mxu0
    %v1558 = vadd.f32 0.0, %v1557
    %v1559 = vpop.f32.mrb[0].mxu0
    %1560 = vdwg.mxu0
    %1561 = vrot.lane.b32.xlu0 %v333, 80
    %v1562 = vpop.permute.xlu0 %1561
    %v1565 = vsel %vm972, %v1099, 0
    %1567 = vmatprep.subr.mxu0 0.0
    %1568 = vmatpush1.msra.mxu0 %v1562
    %1569 = vmatprep.subr.mxu0 0.0
    %1570 = vmatpush1.msra.mxu0 0.0
    %1571 = vmatprep.subr.mxu0 0.0
    %1572 = vmatpush1.msra.mxu0 0.0
    %1573 = vmatprep.subr.mxu0 0.0
    %1574 = vmatpush1.msra.mxu0 0.0
    %1575 = vmatprep.subr.mxu0 0.0
    %1576 = vmatpush1.msra.mxu0 0.0
    %1577 = vmatprep.subr.mxu0 0.0
    %1578 = vmatpush1.msra.mxu0 0.0
    %1579 = vmatprep.subr.mxu0 0.0
    %1580 = vmatpush1.msra.mxu0 0.0
    %1581 = vmatprep.subr.mxu0 0.0
    %1582 = vmatpush1.msra.mxu0 0.0
    %1583 = vmatprep.subr.mxu0 0.0
    %1584 = vmatpush1.msra.mxu0 0.0
    %1585 = vmatprep.subr.mxu0 0.0
    %1586 = vmatpush1.msra.mxu0 0.0
    %1587 = vmatprep.subr.mxu0 0.0
    %1588 = vmatpush1.msra.mxu0 0.0
    %1589 = vmatprep.subr.mxu0 0.0
    %1590 = vmatpush1.msra.mxu0 0.0
    %1591 = vmatprep.subr.mxu0 0.0
    %1592 = vmatpush1.msra.mxu0 0.0
    %1593 = vmatprep.subr.mxu0 0.0
    %1594 = vmatpush1.msra.mxu0 0.0
    %1595 = vmatprep.subr.mxu0 0.0
    %1596 = vmatpush1.msra.mxu0 0.0
    %1597 = vmatprep.subr.mxu0 0.0
    %1598 = vmatpush1.msra.mxu0 0.0
    %1599 = vmatprep.subr.mxu0 0.0
    %1600 = vmatpush1.msra.mxu0 0.0
    %1601 = vmatprep.subr.mxu0 0.0
    %1602 = vmatpush1.msra.mxu0 0.0
    %1603 = vmatprep.subr.mxu0 0.0
    %1604 = vmatpush1.msra.mxu0 0.0
    %1605 = vmatprep.subr.mxu0 0.0
    %1606 = vmatpush1.msra.mxu0 0.0
    %1607 = vmatprep.subr.mxu0 0.0
    %1608 = vmatpush1.msra.mxu0 0.0
    %1609 = vmatprep.subr.mxu0 0.0
    %1610 = vmatpush1.msra.mxu0 0.0
    %1611 = vmatprep.subr.mxu0 0.0
    %1612 = vmatpush1.msra.mxu0 0.0
    %1613 = vmatprep.subr.mxu0 0.0
    %1614 = vmatpush1.msra.mxu0 0.0
    %1615 = vmatprep.subr.mxu0 0.0
    %1616 = vmatpush1.msra.mxu0 0.0
    %1617 = vmatprep.subr.mxu0 0.0
    %1618 = vmatpush1.msra.mxu0 0.0
    %1619 = vmatprep.subr.mxu0 0.0
    %1620 = vmatpush1.msra.mxu0 0.0
    %1621 = vmatprep.subr.mxu0 0.0
    %1622 = vmatpush1.msra.mxu0 0.0
    %1623 = vmatprep.subr.mxu0 0.0
    %1624 = vmatpush1.msra.mxu0 0.0
    %1625 = vmatprep.subr.mxu0 0.0
    %1626 = vmatpush1.msra.mxu0 0.0
    %1627 = vmatprep.subr.mxu0 0.0
    %1628 = vmatpush1.msra.mxu0 0.0
    %1629 = vmatprep.subr.mxu0 0.0
    %1630 = vmatpush1.msra.mxu0 0.0
    %1631 = vmatprep.mubr.f32.mxu0 0.0
    %1632 = vmatmul.mubr.f32.gmra.mrb[0].mxu0 %v1565
    %v1633 = vpop.f32.mrb[0].mxu0
    %v1634 = vadd.f32 0.0, %v1633
    %v1635 = vpop.f32.mrb[0].mxu0
    %1636 = vdwg.mxu0
    %1637 = vrot.lane.b32.xlu0 %v338, 80
    %v1638 = vpop.permute.xlu0 %1637
    %v1641 = vsel %vm972, %v1100, 0
    %1643 = vmatprep.subr.mxu0 0.0
    %1644 = vmatpush1.msra.mxu0 %v1638
    %1645 = vmatprep.subr.mxu0 0.0
    %1646 = vmatpush1.msra.mxu0 0.0
    %1647 = vmatprep.subr.mxu0 0.0
    %1648 = vmatpush1.msra.mxu0 0.0
    %1649 = vmatprep.subr.mxu0 0.0
    %1650 = vmatpush1.msra.mxu0 0.0
    %1651 = vmatprep.subr.mxu0 0.0
    %1652 = vmatpush1.msra.mxu0 0.0
    %1653 = vmatprep.subr.mxu0 0.0
    %1654 = vmatpush1.msra.mxu0 0.0
    %1655 = vmatprep.subr.mxu0 0.0
    %1656 = vmatpush1.msra.mxu0 0.0
    %1657 = vmatprep.subr.mxu0 0.0
    %1658 = vmatpush1.msra.mxu0 0.0
    %1659 = vmatprep.subr.mxu0 0.0
    %1660 = vmatpush1.msra.mxu0 0.0
    %1661 = vmatprep.subr.mxu0 0.0
    %1662 = vmatpush1.msra.mxu0 0.0
    %1663 = vmatprep.subr.mxu0 0.0
    %1664 = vmatpush1.msra.mxu0 0.0
    %1665 = vmatprep.subr.mxu0 0.0
    %1666 = vmatpush1.msra.mxu0 0.0
    %1667 = vmatprep.subr.mxu0 0.0
    %1668 = vmatpush1.msra.mxu0 0.0
    %1669 = vmatprep.subr.mxu0 0.0
    %1670 = vmatpush1.msra.mxu0 0.0
    %1671 = vmatprep.subr.mxu0 0.0
    %1672 = vmatpush1.msra.mxu0 0.0
    %1673 = vmatprep.subr.mxu0 0.0
    %1674 = vmatpush1.msra.mxu0 0.0
    %1675 = vmatprep.subr.mxu0 0.0
    %1676 = vmatpush1.msra.mxu0 0.0
    %1677 = vmatprep.subr.mxu0 0.0
    %1678 = vmatpush1.msra.mxu0 0.0
    %1679 = vmatprep.subr.mxu0 0.0
    %1680 = vmatpush1.msra.mxu0 0.0
    %1681 = vmatprep.subr.mxu0 0.0
    %1682 = vmatpush1.msra.mxu0 0.0
    %1683 = vmatprep.subr.mxu0 0.0
    %1684 = vmatpush1.msra.mxu0 0.0
    %1685 = vmatprep.subr.mxu0 0.0
    %1686 = vmatpush1.msra.mxu0 0.0
    %1687 = vmatprep.subr.mxu0 0.0
    %1688 = vmatpush1.msra.mxu0 0.0
    %1689 = vmatprep.subr.mxu0 0.0
    %1690 = vmatpush1.msra.mxu0 0.0
    %1691 = vmatprep.subr.mxu0 0.0
    %1692 = vmatpush1.msra.mxu0 0.0
    %1693 = vmatprep.subr.mxu0 0.0
    %1694 = vmatpush1.msra.mxu0 0.0
    %1695 = vmatprep.subr.mxu0 0.0
    %1696 = vmatpush1.msra.mxu0 0.0
    %1697 = vmatprep.subr.mxu0 0.0
    %1698 = vmatpush1.msra.mxu0 0.0
    %1699 = vmatprep.subr.mxu0 0.0
    %1700 = vmatpush1.msra.mxu0 0.0
    %1701 = vmatprep.subr.mxu0 0.0
    %1702 = vmatpush1.msra.mxu0 0.0
    %1703 = vmatprep.subr.mxu0 0.0
    %1704 = vmatpush1.msra.mxu0 0.0
    %1705 = vmatprep.subr.mxu0 0.0
    %1706 = vmatpush1.msra.mxu0 0.0
    %1707 = vmatprep.mubr.f32.mxu0 0.0
    %1708 = vmatmul.mubr.f32.gmra.mrb[0].mxu0 %v1641
    %v1709 = vpop.f32.mrb[0].mxu0
    %v1710 = vadd.f32 0.0, %v1709
    %v1711 = vpop.f32.mrb[0].mxu0
    %1712 = vdwg.mxu0
    %1715 = vrot.lane.b32.xlu0 %v1329, 16
    %v1716 = vpop.permute.xlu0 %1715
    %1717 = vrot.lane.b32.xlu0 %v1406, 16
    %v1718 = vpop.permute.xlu0 %1717
    %1723 = vrot.lane.b32.xlu0 %v1482, 32
    %v1724 = vpop.permute.xlu0 %1723
    %1725 = vrot.lane.b32.xlu0 %v1558, 32
    %v1726 = vpop.permute.xlu0 %1725
    %1731 = vrot.lane.b32.xlu0 %v1634, 48
    %v1732 = vpop.permute.xlu0 %1731
    %1733 = vrot.lane.b32.xlu0 %v1710, 48
    %v1734 = vpop.permute.xlu0 %1733
    %v1737 = vsel %vm343, %v1179, %v1716
    %v1738 = vsel %vm343, %v1252, %v1718
    %vm1739 = vcmask 261120
    %v1740 = vsel %vm1739, %v1737, %v1724
    %v1741 = vsel %vm1739, %v1738, %v1726
    %vm1742 = vcmask 392192
    %v1743 = vsel %vm1742, %v1740, %v1732
    %v1744 = vsel %vm1742, %v1741, %v1734
    %v1745 = vld [vmem:[%s5] sm:$0xff]
    %v1746 = vld [vmem:[%s5 + $0x8] sm:$0xff]
    %v1747 = vld [vmem:[%s5 + $0x10] sm:$0xff]
    %v1748 = vld [vmem:[%s5 + $0x18] sm:$0xff]
    %v1749 = vld [vmem:[%s5 + $0x20] sm:$0xff]
    %v1750 = vld [vmem:[%s5 + $0x28] sm:$0xff]
    %v1751 = vld [vmem:[%s5 + $0x30] sm:$0xff]
    %v1752 = vld [vmem:[%s5 + $0x38] sm:$0xff]
    %v1753 = vld [vmem:[%s6] sm:$0x1]
    %v1755 = vlaneseq
    %v1756 = vshrl.u32 %v1755, 7
    %v1757 = vsub.s32 0, %v1756
    %v1758 = vrot.slane %v1753, %v1757
    %vm1760 = vcmask 523264
    %v1762 = vsel %vm1760, %v1743, 0
    %v1765 = vsel %vm1760, %v1744, 0
    %1767 = vmatprep.subr.mxu0 0.0
    %1768 = vmatpush1.msra.mxu0 %v1745
    %1769 = vmatprep.subr.mxu0 0.0
    %1770 = vmatpush1.msra.mxu0 %v1746
    %1771 = vmatprep.subr.mxu0 0.0
    %1772 = vmatpush1.msra.mxu0 %v1747
    %1773 = vmatprep.subr.mxu0 0.0
    %1774 = vmatpush1.msra.mxu0 %v1748
    %1775 = vmatprep.subr.mxu0 0.0
    %1776 = vmatpush1.msra.mxu0 %v1749
    %1777 = vmatprep.subr.mxu0 0.0
    %1778 = vmatpush1.msra.mxu0 %v1750
    %1779 = vmatprep.subr.mxu0 0.0
    %1780 = vmatpush1.msra.mxu0 %v1751
    %1781 = vmatprep.subr.mxu0 0.0
    %1782 = vmatpush1.msra.mxu0 %v1752
    %1783 = vmatprep.subr.mxu0 0.0
    %1784 = vmatpush1.msra.mxu0 0.0
    %1785 = vmatprep.subr.mxu0 0.0
    %1786 = vmatpush1.msra.mxu0 0.0
    %1787 = vmatprep.subr.mxu0 0.0
    %1788 = vmatpush1.msra.mxu0 0.0
    %1789 = vmatprep.subr.mxu0 0.0
    %1790 = vmatpush1.msra.mxu0 0.0
    %1791 = vmatprep.subr.mxu0 0.0
    %1792 = vmatpush1.msra.mxu0 0.0
    %1793 = vmatprep.subr.mxu0 0.0
    %1794 = vmatpush1.msra.mxu0 0.0
    %1795 = vmatprep.subr.mxu0 0.0
    %1796 = vmatpush1.msra.mxu0 0.0
    %1797 = vmatprep.subr.mxu0 0.0
    %1798 = vmatpush1.msra.mxu0 0.0
    %1799 = vmatprep.subr.mxu0 0.0
    %1800 = vmatpush1.msra.mxu0 0.0
    %1801 = vmatprep.subr.mxu0 0.0
    %1802 = vmatpush1.msra.mxu0 0.0
    %1803 = vmatprep.subr.mxu0 0.0
    %1804 = vmatpush1.msra.mxu0 0.0
    %1805 = vmatprep.subr.mxu0 0.0
    %1806 = vmatpush1.msra.mxu0 0.0
    %1807 = vmatprep.subr.mxu0 0.0
    %1808 = vmatpush1.msra.mxu0 0.0
    %1809 = vmatprep.subr.mxu0 0.0
    %1810 = vmatpush1.msra.mxu0 0.0
    %1811 = vmatprep.subr.mxu0 0.0
    %1812 = vmatpush1.msra.mxu0 0.0
    %1813 = vmatprep.subr.mxu0 0.0
    %1814 = vmatpush1.msra.mxu0 0.0
    %1815 = vmatprep.subr.mxu0 0.0
    %1816 = vmatpush1.msra.mxu0 0.0
    %1817 = vmatprep.subr.mxu0 0.0
    %1818 = vmatpush1.msra.mxu0 0.0
    %1819 = vmatprep.subr.mxu0 0.0
    %1820 = vmatpush1.msra.mxu0 0.0
    %1821 = vmatprep.subr.mxu0 0.0
    %1822 = vmatpush1.msra.mxu0 0.0
    %1823 = vmatprep.subr.mxu0 0.0
    %1824 = vmatpush1.msra.mxu0 0.0
    %1825 = vmatprep.subr.mxu0 0.0
    %1826 = vmatpush1.msra.mxu0 0.0
    %1827 = vmatprep.subr.mxu0 0.0
    %1828 = vmatpush1.msra.mxu0 0.0
    %1829 = vmatprep.subr.mxu0 0.0
    %1830 = vmatpush1.msra.mxu0 0.0
    %1831 = vmatprep.mubr.f32.mxu0 0.0
    %1832 = vmatmul.mubr.f32.gmra.mrb[0].mxu0 %v1762
    %v1833 = vpop.f32.mrb[0].mxu0
    %v1834 = vadd.f32 %v1758, %v1833
    %v1835 = vpop.f32.mrb[0].mxu0
    %1836 = vmatprep.mubr.f32.mxu0 0.0
    %1837 = vmatmul.mubr.f32.gmra.mrb[0].mxu0 %v1765
    %v1838 = vpop.f32.mrb[0].mxu0
    %v1839 = vadd.f32 %v1758, %v1838
    %v1840 = vpop.f32.mrb[0].mxu0
    %1841 = vdwg.mxu0
    %v1842 = vadd.f32 %v1834, %v159
    %v1843 = vadd.f32 %v1839, %v164
    %v1844 = vsel %vm1760, %v1842, 0.0
    %1845 = vadd.xlane.f32.xlu0 %v1844
    %v1846 = vpop.xlane.xlu0 %1845
    %v1847 = vsel %vm1760, %v1843, 0.0
    %1848 = vadd.xlane.f32.xlu0 %v1847
    %v1849 = vpop.xlane.xlu0 %1848
    %v1850 = vrcp.pop 64.0
    %v1851 = vmul.f32 %v1846, %v1850
    %v1852 = vmul.f32 %v1849, %v1850
    %v1853 = vsub.f32 %v1842, %v1851
    %v1854 = vsub.f32 %v1843, %v1852
    %v1855 = vmul.f32 %v1853, %v1853
    %v1856 = vmul.f32 %v1854, %v1854
    %v1857 = vsel %vm1760, %v1855, 0.0
    %1858 = vadd.xlane.f32.xlu0 %v1857
    %v1859 = vpop.xlane.xlu0 %1858
    %v1860 = vsel %vm1760, %v1856, 0.0
    %1861 = vadd.xlane.f32.xlu0 %v1860
    %v1862 = vpop.xlane.xlu0 %1861
    %v1863 = vmul.f32 %v1859, %v1850
    %v1864 = vmul.f32 %v1862, %v1850
    %v1865 = vadd.f32 %v1863, 1e-06
    %v1866 = vadd.f32 %v1864, 1e-06
    %v1867 = vrsqrt.pop %v1865
    %v1868 = vrsqrt.pop %v1866
    %v1869 = vmul.f32 %v1853, %v1867
    %v1870 = vmul.f32 %v1854, %v1868
    %v1871 = vld [vmem:[%s7] sm:$0x1]
    %v1873 = vlaneseq
    %v1874 = vshrl.u32 %v1873, 7
    %v1875 = vsub.s32 0, %v1874
    %v1876 = vrot.slane %v1871, %v1875
    %v1878 = vmul.f32 %v1869, %v1876
    %v1879 = vmul.f32 %v1870, %v1876
    %v1880 = vld [vmem:[%s8] sm:$0x1]
    %v1882 = vlaneseq
    %v1883 = vshrl.u32 %v1882, 7
    %v1884 = vsub.s32 0, %v1883
    %v1885 = vrot.slane %v1880, %v1884
    %v1887 = vadd.f32 %v1878, %v1885
    %v1888 = vadd.f32 %v1879, %v1885
    %1891 = vrot.lane.b32.xlu0 %v159, 64
    %v1892 = vpop.permute.xlu0 %1891
    %1893 = vrot.lane.b32.xlu0 %v164, 64
    %v1894 = vpop.permute.xlu0 %1893
    %v1897 = vsel %vm1760, %v1887, %v1892
    %v1898 = vsel %vm1760, %v1888, %v1894
    %1899 = vst [vmem:[#allocation2] sm:$0xff] %v1897
    %1900 = vst [vmem:[#allocation2 + $0x8] sm:$0xff] %v1898
    // Predicated region
    $region38: #{tpu_custom_call.1} parent=1 // pred_check
      _
    $region39: #{tpu_custom_call.1} parent=1 // pred_check_branch
      %1902 = sbr.rel (0) target = $region41
    $region40: #{tpu_custom_call.1} parent=1 // pred_region
      %s1904 = ssub.s32 256, 256
      %1905 = vsyncadd [#allocation3], %s1904
      %s1906 = sshll.u32 [#allocation2], 4
      %s1907 = int_to_ptr.vmem [resolvable:$true] %s1906
      %1912 = dma.vmem_to_hbm [thread:$0]  %s1907, 256, %s9, [#allocation3], 128, 128, 8
    $region41: #{tpu_custom_call.1} parent=1 // pred_fallthru
      _
    // Predicated region
    $region42: #{tpu_custom_call.1} parent=1 // pred_check
      _
    $region43: #{tpu_custom_call.1} parent=1 // pred_check_branch
      %1914 = sbr.rel (0) target = $region45
    $region44: #{tpu_custom_call.1} parent=1 // pred_region
      %s1916 = ssub.s32 1024, 1024
      %1917 = vsyncadd [#allocation5], %s1916
      %s1918 = sshll.u32 [#allocation4], 4
      %s1919 = int_to_ptr.vmem [resolvable:$true] %s1918
      %1924 = dma.vmem_to_hbm [thread:$0]  %s1919, 1024, %s10, [#allocation5], 128, 128, 8
    $region45: #{tpu_custom_call.1} parent=1 // pred_fallthru
      _
    // Predicated region
    $region46: #{tpu_custom_call.1} parent=1 // pred_check
      _
    $region47: #{tpu_custom_call.1} parent=1 // pred_check_branch
      %1926 = sbr.rel (0) target = $region49
    $region48: #{tpu_custom_call.1} parent=1 // pred_region
      %1927 = dma.done [#allocation3], 256
    $region49: #{tpu_custom_call.1} parent=1 // pred_fallthru
      _
    // Predicated region
    $region50: #{tpu_custom_call.1} parent=1 // pred_check
      _
    $region51: #{tpu_custom_call.1} parent=1 // pred_check_branch
      %1929 = sbr.rel (0) target = $region53
    $region52: #{tpu_custom_call.1} parent=1 // pred_region
      %1930 = dma.done [#allocation5], 1024
    $region53: #{tpu_custom_call.1} parent=1 // pred_fallthru
      _
    %1931 = vsyncpa [#allocation3], 1
    %1932 = vsyncpa [#allocation5], 1

</llo_original>
